<compile_context>
chip_gen: v6e
topology: v6e:2x2x1
jax: 0.10.0
libtpu: 0.0.40
codegen_flags: <defaults>
</compile_context>

<pallas_src>
import numpy as np
import jax
import jax.numpy as jnp
from jax import lax
from jax.experimental import pallas as pl
from jax.experimental.pallas import tpu as pltpu

# ---------------------------------------------------------------------------
# Static architecture constants (from Net.__init__ + the small 32x32 input)
# ---------------------------------------------------------------------------
KH = KW = 5
H_IN = W_IN = 32
C_IN = 3
C1 = 6                      # conv1 out channels
C2 = 16                     # conv2 out channels
H1 = W1 = H_IN - KH + 1     # 28
HP1 = WP1 = H1 // 2         # 14
H2 = W2 = HP1 - KH + 1      # 10
HP2 = WP2 = H2 // 2         # 5
N_FC1, N_FC2, N_CLS = 120, 84, 2
FLAT = C2 * HP2 * WP2       # 400
OFF_H1 = ((HP1 + 7) // 8) * 8   # 16  (sublane-aligned offset for odd-row block)
OFF_H2 = ((HP2 + 7) // 8) * 8   # 8
LANE_OFF = 128                  # lane-aligned offset for odd-column block


# ---------------------------------------------------------------------------
# Single fused Pallas kernel: one grid step == one block of `block_b` samples
# ---------------------------------------------------------------------------
def _net_kernel(x_ref, w1_ref, b1_ref, sh1_ref, sw1_ref,
                w2_ref, b2_ref, sh2_ref, sw2_ref,
                wf1_ref, bf1_ref, wf2_ref, bf2_ref, wf3_ref, bf3_ref,
                o_ref):
    f32, bf16 = jnp.float32, jnp.bfloat16
    bb = x_ref.shape[0]           # samples per grid step (static)

    flat_rows = []
    for b in range(bb):           # static unroll over the batch block
        xs = x_ref[b]             # (32, 96) f32, channels-minor

        # ---- conv1 + ReLU: block-Toeplitz matmuls, bias-seeded f32 accum ----
        acc = jnp.broadcast_to(b1_ref[...], (H1, W1 * C1))
        for kh in range(KH):
            acc = acc + jnp.dot(xs[kh:kh + H1, :].astype(bf16), w1_ref[kh],
                                preferred_element_type=f32)
        y = jnp.maximum(acc, 0.0)                                   # (28, 168)

        # ---- maxpool1 2x2: 0/1 selection matmuls + elementwise max ---------
        p = jnp.dot(sh1_ref[...], y.astype(bf16),
                    preferred_element_type=f32)                     # (32, 168)
        mh = jnp.maximum(p[0:HP1, :], p[OFF_H1:OFF_H1 + HP1, :])    # (14, 168)
        q = jnp.dot(mh.astype(bf16), sw1_ref[...],
                    preferred_element_type=f32)                     # (14, 256)
        x1 = jnp.maximum(q[:, 0:WP1 * C1],
                         q[:, LANE_OFF:LANE_OFF + WP1 * C1])        # (14, 84)

        # ---- conv2 + ReLU ----------------------------------------------------
        acc = jnp.broadcast_to(b2_ref[...], (H2, W2 * C2))
        for kh in range(KH):
            acc = acc + jnp.dot(x1[kh:kh + H2, :].astype(bf16), w2_ref[kh],
                                preferred_element_type=f32)
        y = jnp.maximum(acc, 0.0)                                   # (10, 160)

        # ---- maxpool2 2x2 ----------------------------------------------------
        p = jnp.dot(sh2_ref[...], y.astype(bf16),
                    preferred_element_type=f32)                     # (16, 160)
        mh = jnp.maximum(p[0:HP2, :], p[OFF_H2:OFF_H2 + HP2, :])    # (5, 160)
        q = jnp.dot(mh.astype(bf16), sw2_ref[...],
                    preferred_element_type=f32)                     # (5, 256)
        x2 = jnp.maximum(q[:, 0:WP2 * C2],
                         q[:, LANE_OFF:LANE_OFF + WP2 * C2])        # (5, 80)

        # ---- flatten (h, w, c) -> one lane-dense (1, 400) row ---------------
        flat_rows.append(jnp.concatenate(
            [x2[r:r + 1, :] for r in range(HP2)], axis=1))          # (1, 400)

    flat = flat_rows[0] if bb == 1 else jnp.concatenate(flat_rows, axis=0)

    # ---- batched fc1 -> relu -> fc2 -> relu -> fc3 (one matmul each) --------
    h = jnp.dot(flat.astype(bf16), wf1_ref[...],
                preferred_element_type=f32) + bf1_ref[...]
    h = jnp.maximum(h, 0.0)
    h = jnp.dot(h.astype(bf16), wf2_ref[...],
                preferred_element_type=f32) + bf2_ref[...]
    h = jnp.maximum(h, 0.0)
    out = jnp.dot(h.astype(bf16), wf3_ref[...],
                  preferred_element_type=f32) + bf3_ref[...]
    o_ref[0] = out.astype(o_ref.dtype)                              # (bb, 2)


# ---------------------------------------------------------------------------
# One-time (offline) parameter preprocessing
# ---------------------------------------------------------------------------
def _conv_toeplitz(w_oihw, w_in):
    """(Cout,Cin,KH,KW) -> (KH, w_in*Cin, w_out*Cout) block-Toeplitz matrices."""
    c_out, c_in, kh, kw = w_oihw.shape
    w_out = w_in - kw + 1
    wt = np.transpose(w_oihw, (2, 3, 1, 0))      # (kh, kw, ci, co)
    big = np.zeros((kh, w_in * c_in, w_out * c_out), np.float32)
    for i in range(kh):
        for j in range(kw):
            for wo in range(w_out):
                big[i, (wo + j) * c_in:(wo + j + 1) * c_in,
                       wo * c_out:(wo + 1) * c_out] = wt[i, j]
    return big


def _make_pool_selectors(h_out, w_out, c, off_h):
    """0/1 selection matrices implementing 2x2 max-pool via matmul + max."""
    hp, wp = h_out // 2, w_out // 2
    selh = np.zeros((2 * off_h, h_out), np.float32)
    for r in range(hp):
        selh[r, 2 * r] = 1.0                      # even rows -> block at 0
        selh[off_h + r, 2 * r + 1] = 1.0          # odd rows  -> aligned block
    selw = np.zeros((w_out * c, 2 * LANE_OFF), np.float32)
    for w in range(wp):
        for ch in range(c):
            selw[(2 * w) * c + ch, w * c + ch] = 1.0
            selw[(2 * w + 1) * c + ch, LANE_OFF + w * c + ch] = 1.0
    return selh, selw


def prepare_kernel_params(p):
    w1 = np.asarray(p["w_conv1"], np.float32)
    w2 = np.asarray(p["w_conv2"], np.float32)
    b1 = np.asarray(p["b_conv1"], np.float32)
    b2 = np.asarray(p["b_conv2"], np.float32)
    wf1 = np.asarray(p["w_fc1"], np.float32)      # (400, 120), rows in (c,h,w)

    sh1, sw1 = _make_pool_selectors(H1, W1, C1, OFF_H1)
    sh2, sw2 = _make_pool_selectors(H2, W2, C2, OFF_H2)

    kp = dict(
        w1=_conv_toeplitz(w1, W_IN),                                  # (5, 96, 168)
        b1=np.tile(b1, W1)[None, :],                                  # (1, 168)
        sh1=sh1, sw1=sw1,
        w2=_conv_toeplitz(w2, WP1),                                   # (5, 84, 160)
        b2=np.tile(b2, W2)[None, :],                                  # (1, 160)
        sh2=sh2, sw2=sw2,
        # reorder fc1 rows (c,h,w) -> (h*W*C + w*C + c): no in-kernel transpose
        wf1=wf1.reshape(C2, HP2, WP2, N_FC1).transpose(1, 2, 0, 3)
               .reshape(FLAT, N_FC1),                                 # (400, 120)
        bf1=np.asarray(p["b_fc1"], np.float32),
        bf2=np.asarray(p["b_fc2"], np.float32),
        bf3=np.asarray(p["b_fc3"], np.float32),
        wf2=np.asarray(p["w_fc2"], np.float32),
        wf3=np.asarray(p["w_fc3"], np.float32),
    )
    # matmul operands (weights + 0/1 selectors) stored bf16; biases stay f32.
    bf16_keys = {"w1", "w2", "sh1", "sw1", "sh2", "sw2", "wf1", "wf2", "wf3"}
    return {k: jnp.asarray(v, dtype=(jnp.bfloat16 if k in bf16_keys
                                     else jnp.float32)) for k, v in kp.items()}


def prepare_inputs(x_nchw):
    """One-time data-layout prep: NCHW -> (N, H, W*Cin), channels-minor."""
    n = x_nchw.shape[0]
    return jnp.transpose(x_nchw, (0, 2, 3, 1)).reshape(
        n, H_IN, W_IN * C_IN).astype(jnp.float32)


# ---------------------------------------------------------------------------
# Wrapper: one fused pallas_call; batch blocked on a "parallel" grid axis
# ---------------------------------------------------------------------------
def _full_spec(a):
    nd = a.ndim
    return pl.BlockSpec(a.shape, lambda i, _nd=nd: (0,) * _nd)


def _pick_block_b(n, max_b=8):
    """Largest divisor of n (<= max_b) that still leaves >= 2 grid steps."""
    best = 1
    for b in range(1, min(n, max_b) + 1):
        if n % b == 0 and n // b >= 2:
            best = b
    return best


def net_forward(x_prep, kp, block_b=None):
    n = x_prep.shape[0]
    if block_b is None:
        block_b = _pick_block_b(n)
    assert n % block_b == 0
    steps = n // block_b

    args = (kp["w1"], kp["b1"], kp["sh1"], kp["sw1"],
            kp["w2"], kp["b2"], kp["sh2"], kp["sw2"],
            kp["wf1"], kp["bf1"], kp["wf2"], kp["bf2"], kp["wf3"], kp["bf3"])
    in_specs = ([pl.BlockSpec((block_b, H_IN, W_IN * C_IN), lambda i: (i, 0, 0))]
                + [_full_spec(a) for a in args])

    fl_conv1 = 2 * KH * H1 * (W_IN * C_IN) * (W1 * C1)
    fl_pool1 = 2 * (2 * OFF_H1) * H1 * (W1 * C1) + 2 * HP1 * (W1 * C1) * (2 * LANE_OFF)
    fl_conv2 = 2 * KH * H2 * (WP1 * C1) * (W2 * C2)
    fl_pool2 = 2 * (2 * OFF_H2) * H2 * (W2 * C2) + 2 * HP2 * (W2 * C2) * (2 * LANE_OFF)
    fl_fc = 2 * (FLAT * N_FC1 + N_FC1 * N_FC2 + N_FC2 * N_CLS)
    flops = int(n * (fl_conv1 + fl_pool1 + fl_conv2 + fl_pool2 + fl_fc))
    w_bytes = sum(int(a.size) * int(a.dtype.itemsize) for a in args)
    bytes_accessed = int(steps * w_bytes
                         + int(x_prep.size) * int(x_prep.dtype.itemsize)
                         + n * N_CLS * 4)

    out = pl.pallas_call(
        _net_kernel,
        grid=(steps,),
        in_specs=in_specs,
        out_specs=pl.BlockSpec((1, block_b, N_CLS), lambda i: (i, 0, 0)),
        out_shape=jax.ShapeDtypeStruct((steps, block_b, N_CLS), jnp.float32),
        compiler_params=pltpu.CompilerParams(dimension_semantics=("parallel",)),
        cost_estimate=pl.CostEstimate(flops=flops, transcendentals=0,
                                      bytes_accessed=bytes_accessed),
    )(x_prep, *args)
    return out.reshape(n, N_CLS)


# ---------------------------------------------------------------------------
# Deterministic parameter init (canonical PyTorch-style layouts)
# ---------------------------------------------------------------------------
def init_params(key, flat_dim):
    ks = jax.random.split(key, 10)

    def unif(k, shape, fan_in):
        bound = 1.0 / jnp.sqrt(jnp.float32(fan_in))
        return jax.random.uniform(k, shape, jnp.float32, -bound, bound)

    return {
        "w_conv1": unif(ks[0], (C1, C_IN, KH, KW), C_IN * KH * KW),
        "b_conv1": unif(ks[1], (C1,), C_IN * KH * KW),
        "w_conv2": unif(ks[2], (C2, C1, KH, KW), C1 * KH * KW),
        "b_conv2": unif(ks[3], (C2,), C1 * KH * KW),
        # Linear weights stored as (in, out) = torch weight transposed;
        # fc1 rows follow the NCHW flatten ordering (c, h, w).
        "w_fc1": unif(ks[4], (flat_dim, N_FC1), flat_dim),
        "b_fc1": unif(ks[5], (1, N_FC1), flat_dim),
        "w_fc2": unif(ks[6], (N_FC1, N_FC2), N_FC1),
        "b_fc2": unif(ks[7], (1, N_FC2), N_FC1),
        "w_fc3": unif(ks[8], (N_FC2, N_CLS), N_FC2),
        "b_fc3": unif(ks[9], (1, N_CLS), N_FC2),
    }


# ---------------------------------------------------------------------------
# Pure-JAX reference (correctness check against the PyTorch semantics)
# ---------------------------------------------------------------------------
def net_forward_ref(x_nchw, p):
    hi = lax.Precision.HIGHEST
    y = lax.conv_general_dilated(x_nchw, p["w_conv1"], (1, 1), "VALID",
                                 dimension_numbers=("NCHW", "OIHW", "NCHW"),
                                 precision=hi) + p["b_conv1"].reshape(1, -1, 1, 1)
    y = jnp.maximum(y, 0.0)
    y = lax.reduce_window(y, -jnp.inf, lax.max, (1, 1, 2, 2), (1, 1, 2, 2), "VALID")
    y = lax.conv_general_dilated(y, p["w_conv2"], (1, 1), "VALID",
                                 dimension_numbers=("NCHW", "OIHW", "NCHW"),
                                 precision=hi) + p["b_conv2"].reshape(1, -1, 1, 1)
    y = jnp.maximum(y, 0.0)
    y = lax.reduce_window(y, -jnp.inf, lax.max, (1, 1, 2, 2), (1, 1, 2, 2), "VALID")
    y = y.reshape(y.shape[0], -1)                    # NCHW flatten
    y = jnp.maximum(jnp.dot(y, p["w_fc1"], precision=hi) + p["b_fc1"], 0.0)
    y = jnp.maximum(jnp.dot(y, p["w_fc2"], precision=hi) + p["b_fc2"], 0.0)
    return jnp.dot(y, p["w_fc3"], precision=hi) + p["b_fc3"]


if __name__ == "__main__":
    key = jax.random.PRNGKey(0)
    k_x, k_p = jax.random.split(key)

    N = 2
    x = jax.random.normal(k_x, (N, C_IN, H_IN, W_IN), jnp.float32)

    params = init_params(k_p, FLAT)          # canonical layouts (also for ref)
    kparams = prepare_kernel_params(params)  # one-time offline repack (bf16)
    x_prep = prepare_inputs(x)               # one-time input-layout prep

    fwd = jax.jit(net_forward)
    out = jax.block_until_ready(fwd(x_prep, kparams))
    assert out.shape == (N, N_CLS)

    ref = jax.block_until_ready(net_forward_ref(x, params))
    # bf16 matmul operands with f32 accumulation -> slightly looser tolerance.
    assert jnp.allclose(out, ref, atol=2e-2, rtol=2e-2)

    print("KERNEL_OK")
</pallas_src>

<mosaic_0001>
module attributes {stable_mosaic.version = 11 : i64} {
  func.func @_net_kernel(%arg0: i32, %arg1: memref<1x32x96xf32, #tpu.memory_space<vmem>>, %arg2: memref<5x96x168xbf16, #tpu.memory_space<vmem>>, %arg3: memref<1x168xf32, #tpu.memory_space<vmem>>, %arg4: memref<32x28xbf16, #tpu.memory_space<vmem>>, %arg5: memref<168x256xbf16, #tpu.memory_space<vmem>>, %arg6: memref<5x84x160xbf16, #tpu.memory_space<vmem>>, %arg7: memref<1x160xf32, #tpu.memory_space<vmem>>, %arg8: memref<16x10xbf16, #tpu.memory_space<vmem>>, %arg9: memref<160x256xbf16, #tpu.memory_space<vmem>>, %arg10: memref<400x120xbf16, #tpu.memory_space<vmem>>, %arg11: memref<1x120xf32, #tpu.memory_space<vmem>>, %arg12: memref<120x84xbf16, #tpu.memory_space<vmem>>, %arg13: memref<1x84xf32, #tpu.memory_space<vmem>>, %arg14: memref<84x2xbf16, #tpu.memory_space<vmem>>, %arg15: memref<1x2xf32, #tpu.memory_space<vmem>>, %arg16: memref<1x1x2xf32, #tpu.memory_space<vmem>>) attributes {dimension_semantics = [#tpu.dimension_semantics<parallel>], iteration_bounds = array<i64: 2>, scalar_prefetch = 0 : i64, scratch_operands = 0 : i64, tpu.core_type = #tpu.core_type<tc>, window_params = [{transform_indices = @transform_0, window_bounds = array<i64: 1, 32, 96>}, {pipeline_mode = #tpu.pipeline_mode<synchronous>, transform_indices = @transform_1, window_bounds = array<i64: 5, 96, 168>}, {pipeline_mode = #tpu.pipeline_mode<synchronous>, transform_indices = @transform_2, window_bounds = array<i64: 1, 168>}, {pipeline_mode = #tpu.pipeline_mode<synchronous>, transform_indices = @transform_3, window_bounds = array<i64: 32, 28>}, {pipeline_mode = #tpu.pipeline_mode<synchronous>, transform_indices = @transform_4, window_bounds = array<i64: 168, 256>}, {pipeline_mode = #tpu.pipeline_mode<synchronous>, transform_indices = @transform_5, window_bounds = array<i64: 5, 84, 160>}, {pipeline_mode = #tpu.pipeline_mode<synchronous>, transform_indices = @transform_6, window_bounds = array<i64: 1, 160>}, {pipeline_mode = #tpu.pipeline_mode<synchronous>, transform_indices = @transform_7, window_bounds = array<i64: 16, 10>}, {pipeline_mode = #tpu.pipeline_mode<synchronous>, transform_indices = @transform_8, window_bounds = array<i64: 160, 256>}, {pipeline_mode = #tpu.pipeline_mode<synchronous>, transform_indices = @transform_9, window_bounds = array<i64: 400, 120>}, {pipeline_mode = #tpu.pipeline_mode<synchronous>, transform_indices = @transform_10, window_bounds = array<i64: 1, 120>}, {pipeline_mode = #tpu.pipeline_mode<synchronous>, transform_indices = @transform_11, window_bounds = array<i64: 120, 84>}, {pipeline_mode = #tpu.pipeline_mode<synchronous>, transform_indices = @transform_12, window_bounds = array<i64: 1, 84>}, {pipeline_mode = #tpu.pipeline_mode<synchronous>, transform_indices = @transform_13, window_bounds = array<i64: 84, 2>}, {pipeline_mode = #tpu.pipeline_mode<synchronous>, transform_indices = @transform_14, window_bounds = array<i64: 1, 2>}, {transform_indices = @transform_15, window_bounds = array<i64: 1, 1, 2>}]} {
    %c0 = arith.constant 0 : index
    %c0_0 = arith.constant 0 : index
    %c0_1 = arith.constant 0 : index
    %0 = vector.load %arg1[%c0, %c0_0, %c0_1] : memref<1x32x96xf32, #tpu.memory_space<vmem>>, vector<1x32x96xf32>
    %1 = vector.shape_cast %0 : vector<1x32x96xf32> to vector<32x96xf32>
    %c0_2 = arith.constant 0 : index
    %c0_3 = arith.constant 0 : index
    %2 = vector.load %arg3[%c0_2, %c0_3] : memref<1x168xf32, #tpu.memory_space<vmem>>, vector<1x168xf32>
    %3 = vector.shape_cast %2 : vector<1x168xf32> to vector<1x168xf32>
    %4 = vector.broadcast %3 : vector<1x168xf32> to vector<28x168xf32>
    %5 = vector.extract_strided_slice %1 {offsets = [0, 0], sizes = [28, 96], strides = [1, 1]} : vector<32x96xf32> to vector<28x96xf32>
    %6 = arith.truncf %5 : vector<28x96xf32> to vector<28x96xbf16>
    %c0_4 = arith.constant 0 : index
    %c0_5 = arith.constant 0 : index
    %c0_6 = arith.constant 0 : index
    %7 = vector.load %arg2[%c0_4, %c0_5, %c0_6] : memref<5x96x168xbf16, #tpu.memory_space<vmem>>, vector<1x96x168xbf16>
    %8 = vector.shape_cast %7 : vector<1x96x168xbf16> to vector<96x168xbf16>
    %cst = arith.constant dense<0.000000e+00> : vector<28x168xf32>
    %9 = tpu.matmul %6, %8, %cst {dimension_numbers = #tpu.dot_dimension_numbers<[1], [0], [0], [1], [0, 0, 1, 1], [], []>} : vector<28x96xbf16>, vector<96x168xbf16>, vector<28x168xf32> -> vector<28x168xf32>
    %10 = arith.addf %4, %9 : vector<28x168xf32>
    %11 = vector.extract_strided_slice %1 {offsets = [1, 0], sizes = [28, 96], strides = [1, 1]} : vector<32x96xf32> to vector<28x96xf32>
    %12 = arith.truncf %11 : vector<28x96xf32> to vector<28x96xbf16>
    %c1 = arith.constant 1 : index
    %c0_7 = arith.constant 0 : index
    %c0_8 = arith.constant 0 : index
    %13 = vector.load %arg2[%c1, %c0_7, %c0_8] : memref<5x96x168xbf16, #tpu.memory_space<vmem>>, vector<1x96x168xbf16>
    %14 = vector.shape_cast %13 : vector<1x96x168xbf16> to vector<96x168xbf16>
    %cst_9 = arith.constant dense<0.000000e+00> : vector<28x168xf32>
    %15 = tpu.matmul %12, %14, %cst_9 {dimension_numbers = #tpu.dot_dimension_numbers<[1], [0], [0], [1], [0, 0, 1, 1], [], []>} : vector<28x96xbf16>, vector<96x168xbf16>, vector<28x168xf32> -> vector<28x168xf32>
    %16 = arith.addf %10, %15 : vector<28x168xf32>
    %17 = vector.extract_strided_slice %1 {offsets = [2, 0], sizes = [28, 96], strides = [1, 1]} : vector<32x96xf32> to vector<28x96xf32>
    %18 = arith.truncf %17 : vector<28x96xf32> to vector<28x96xbf16>
    %c2 = arith.constant 2 : index
    %c0_10 = arith.constant 0 : index
    %c0_11 = arith.constant 0 : index
    %19 = vector.load %arg2[%c2, %c0_10, %c0_11] : memref<5x96x168xbf16, #tpu.memory_space<vmem>>, vector<1x96x168xbf16>
    %20 = vector.shape_cast %19 : vector<1x96x168xbf16> to vector<96x168xbf16>
    %cst_12 = arith.constant dense<0.000000e+00> : vector<28x168xf32>
    %21 = tpu.matmul %18, %20, %cst_12 {dimension_numbers = #tpu.dot_dimension_numbers<[1], [0], [0], [1], [0, 0, 1, 1], [], []>} : vector<28x96xbf16>, vector<96x168xbf16>, vector<28x168xf32> -> vector<28x168xf32>
    %22 = arith.addf %16, %21 : vector<28x168xf32>
    %23 = vector.extract_strided_slice %1 {offsets = [3, 0], sizes = [28, 96], strides = [1, 1]} : vector<32x96xf32> to vector<28x96xf32>
    %24 = arith.truncf %23 : vector<28x96xf32> to vector<28x96xbf16>
    %c3 = arith.constant 3 : index
    %c0_13 = arith.constant 0 : index
    %c0_14 = arith.constant 0 : index
    %25 = vector.load %arg2[%c3, %c0_13, %c0_14] : memref<5x96x168xbf16, #tpu.memory_space<vmem>>, vector<1x96x168xbf16>
    %26 = vector.shape_cast %25 : vector<1x96x168xbf16> to vector<96x168xbf16>
    %cst_15 = arith.constant dense<0.000000e+00> : vector<28x168xf32>
    %27 = tpu.matmul %24, %26, %cst_15 {dimension_numbers = #tpu.dot_dimension_numbers<[1], [0], [0], [1], [0, 0, 1, 1], [], []>} : vector<28x96xbf16>, vector<96x168xbf16>, vector<28x168xf32> -> vector<28x168xf32>
    %28 = arith.addf %22, %27 : vector<28x168xf32>
    %29 = vector.extract_strided_slice %1 {offsets = [4, 0], sizes = [28, 96], strides = [1, 1]} : vector<32x96xf32> to vector<28x96xf32>
    %30 = arith.truncf %29 : vector<28x96xf32> to vector<28x96xbf16>
    %c4 = arith.constant 4 : index
    %c0_16 = arith.constant 0 : index
    %c0_17 = arith.constant 0 : index
    %31 = vector.load %arg2[%c4, %c0_16, %c0_17] : memref<5x96x168xbf16, #tpu.memory_space<vmem>>, vector<1x96x168xbf16>
    %32 = vector.shape_cast %31 : vector<1x96x168xbf16> to vector<96x168xbf16>
    %cst_18 = arith.constant dense<0.000000e+00> : vector<28x168xf32>
    %33 = tpu.matmul %30, %32, %cst_18 {dimension_numbers = #tpu.dot_dimension_numbers<[1], [0], [0], [1], [0, 0, 1, 1], [], []>} : vector<28x96xbf16>, vector<96x168xbf16>, vector<28x168xf32> -> vector<28x168xf32>
    %34 = arith.addf %28, %33 : vector<28x168xf32>
    %cst_19 = arith.constant 0.000000e+00 : f32
    %35 = vector.broadcast %cst_19 : f32 to vector<28x168xf32>
    %36 = arith.maximumf %34, %35 : vector<28x168xf32>
    %c0_20 = arith.constant 0 : index
    %c0_21 = arith.constant 0 : index
    %37 = vector.load %arg4[%c0_20, %c0_21] : memref<32x28xbf16, #tpu.memory_space<vmem>>, vector<32x28xbf16>
    %38 = arith.truncf %36 : vector<28x168xf32> to vector<28x168xbf16>
    %cst_22 = arith.constant dense<0.000000e+00> : vector<32x168xf32>
    %39 = tpu.matmul %37, %38, %cst_22 {dimension_numbers = #tpu.dot_dimension_numbers<[1], [0], [0], [1], [0, 0, 1, 1], [], []>} : vector<32x28xbf16>, vector<28x168xbf16>, vector<32x168xf32> -> vector<32x168xf32>
    %40 = vector.extract_strided_slice %39 {offsets = [0, 0], sizes = [14, 168], strides = [1, 1]} : vector<32x168xf32> to vector<14x168xf32>
    %41 = vector.extract_strided_slice %39 {offsets = [16, 0], sizes = [14, 168], strides = [1, 1]} : vector<32x168xf32> to vector<14x168xf32>
    %42 = arith.maximumf %40, %41 : vector<14x168xf32>
    %43 = arith.truncf %42 : vector<14x168xf32> to vector<14x168xbf16>
    %c0_23 = arith.constant 0 : index
    %c0_24 = arith.constant 0 : index
    %44 = vector.load %arg5[%c0_23, %c0_24] : memref<168x256xbf16, #tpu.memory_space<vmem>>, vector<168x256xbf16>
    %cst_25 = arith.constant dense<0.000000e+00> : vector<14x256xf32>
    %45 = tpu.matmul %43, %44, %cst_25 {dimension_numbers = #tpu.dot_dimension_numbers<[1], [0], [0], [1], [0, 0, 1, 1], [], []>} : vector<14x168xbf16>, vector<168x256xbf16>, vector<14x256xf32> -> vector<14x256xf32>
    %46 = vector.extract_strided_slice %45 {offsets = [0, 0], sizes = [14, 84], strides = [1, 1]} : vector<14x256xf32> to vector<14x84xf32>
    %47 = vector.extract_strided_slice %45 {offsets = [0, 128], sizes = [14, 84], strides = [1, 1]} : vector<14x256xf32> to vector<14x84xf32>
    %48 = arith.maximumf %46, %47 : vector<14x84xf32>
    %c0_26 = arith.constant 0 : index
    %c0_27 = arith.constant 0 : index
    %49 = vector.load %arg7[%c0_26, %c0_27] : memref<1x160xf32, #tpu.memory_space<vmem>>, vector<1x160xf32>
    %50 = vector.shape_cast %49 : vector<1x160xf32> to vector<1x160xf32>
    %51 = vector.broadcast %50 : vector<1x160xf32> to vector<10x160xf32>
    %52 = vector.extract_strided_slice %48 {offsets = [0, 0], sizes = [10, 84], strides = [1, 1]} : vector<14x84xf32> to vector<10x84xf32>
    %53 = arith.truncf %52 : vector<10x84xf32> to vector<10x84xbf16>
    %c0_28 = arith.constant 0 : index
    %c0_29 = arith.constant 0 : index
    %c0_30 = arith.constant 0 : index
    %54 = vector.load %arg6[%c0_28, %c0_29, %c0_30] : memref<5x84x160xbf16, #tpu.memory_space<vmem>>, vector<1x84x160xbf16>
    %55 = vector.shape_cast %54 : vector<1x84x160xbf16> to vector<84x160xbf16>
    %cst_31 = arith.constant dense<0.000000e+00> : vector<10x160xf32>
    %56 = tpu.matmul %53, %55, %cst_31 {dimension_numbers = #tpu.dot_dimension_numbers<[1], [0], [0], [1], [0, 0, 1, 1], [], []>} : vector<10x84xbf16>, vector<84x160xbf16>, vector<10x160xf32> -> vector<10x160xf32>
    %57 = arith.addf %51, %56 : vector<10x160xf32>
    %58 = vector.extract_strided_slice %48 {offsets = [1, 0], sizes = [10, 84], strides = [1, 1]} : vector<14x84xf32> to vector<10x84xf32>
    %59 = arith.truncf %58 : vector<10x84xf32> to vector<10x84xbf16>
    %c1_32 = arith.constant 1 : index
    %c0_33 = arith.constant 0 : index
    %c0_34 = arith.constant 0 : index
    %60 = vector.load %arg6[%c1_32, %c0_33, %c0_34] : memref<5x84x160xbf16, #tpu.memory_space<vmem>>, vector<1x84x160xbf16>
    %61 = vector.shape_cast %60 : vector<1x84x160xbf16> to vector<84x160xbf16>
    %cst_35 = arith.constant dense<0.000000e+00> : vector<10x160xf32>
    %62 = tpu.matmul %59, %61, %cst_35 {dimension_numbers = #tpu.dot_dimension_numbers<[1], [0], [0], [1], [0, 0, 1, 1], [], []>} : vector<10x84xbf16>, vector<84x160xbf16>, vector<10x160xf32> -> vector<10x160xf32>
    %63 = arith.addf %57, %62 : vector<10x160xf32>
    %64 = vector.extract_strided_slice %48 {offsets = [2, 0], sizes = [10, 84], strides = [1, 1]} : vector<14x84xf32> to vector<10x84xf32>
    %65 = arith.truncf %64 : vector<10x84xf32> to vector<10x84xbf16>
    %c2_36 = arith.constant 2 : index
    %c0_37 = arith.constant 0 : index
    %c0_38 = arith.constant 0 : index
    %66 = vector.load %arg6[%c2_36, %c0_37, %c0_38] : memref<5x84x160xbf16, #tpu.memory_space<vmem>>, vector<1x84x160xbf16>
    %67 = vector.shape_cast %66 : vector<1x84x160xbf16> to vector<84x160xbf16>
    %cst_39 = arith.constant dense<0.000000e+00> : vector<10x160xf32>
    %68 = tpu.matmul %65, %67, %cst_39 {dimension_numbers = #tpu.dot_dimension_numbers<[1], [0], [0], [1], [0, 0, 1, 1], [], []>} : vector<10x84xbf16>, vector<84x160xbf16>, vector<10x160xf32> -> vector<10x160xf32>
    %69 = arith.addf %63, %68 : vector<10x160xf32>
    %70 = vector.extract_strided_slice %48 {offsets = [3, 0], sizes = [10, 84], strides = [1, 1]} : vector<14x84xf32> to vector<10x84xf32>
    %71 = arith.truncf %70 : vector<10x84xf32> to vector<10x84xbf16>
    %c3_40 = arith.constant 3 : index
    %c0_41 = arith.constant 0 : index
    %c0_42 = arith.constant 0 : index
    %72 = vector.load %arg6[%c3_40, %c0_41, %c0_42] : memref<5x84x160xbf16, #tpu.memory_space<vmem>>, vector<1x84x160xbf16>
    %73 = vector.shape_cast %72 : vector<1x84x160xbf16> to vector<84x160xbf16>
    %cst_43 = arith.constant dense<0.000000e+00> : vector<10x160xf32>
    %74 = tpu.matmul %71, %73, %cst_43 {dimension_numbers = #tpu.dot_dimension_numbers<[1], [0], [0], [1], [0, 0, 1, 1], [], []>} : vector<10x84xbf16>, vector<84x160xbf16>, vector<10x160xf32> -> vector<10x160xf32>
    %75 = arith.addf %69, %74 : vector<10x160xf32>
    %76 = vector.extract_strided_slice %48 {offsets = [4, 0], sizes = [10, 84], strides = [1, 1]} : vector<14x84xf32> to vector<10x84xf32>
    %77 = arith.truncf %76 : vector<10x84xf32> to vector<10x84xbf16>
    %c4_44 = arith.constant 4 : index
    %c0_45 = arith.constant 0 : index
    %c0_46 = arith.constant 0 : index
    %78 = vector.load %arg6[%c4_44, %c0_45, %c0_46] : memref<5x84x160xbf16, #tpu.memory_space<vmem>>, vector<1x84x160xbf16>
    %79 = vector.shape_cast %78 : vector<1x84x160xbf16> to vector<84x160xbf16>
    %cst_47 = arith.constant dense<0.000000e+00> : vector<10x160xf32>
    %80 = tpu.matmul %77, %79, %cst_47 {dimension_numbers = #tpu.dot_dimension_numbers<[1], [0], [0], [1], [0, 0, 1, 1], [], []>} : vector<10x84xbf16>, vector<84x160xbf16>, vector<10x160xf32> -> vector<10x160xf32>
    %81 = arith.addf %75, %80 : vector<10x160xf32>
    %cst_48 = arith.constant 0.000000e+00 : f32
    %82 = vector.broadcast %cst_48 : f32 to vector<10x160xf32>
    %83 = arith.maximumf %81, %82 : vector<10x160xf32>
    %c0_49 = arith.constant 0 : index
    %c0_50 = arith.constant 0 : index
    %84 = vector.load %arg8[%c0_49, %c0_50] : memref<16x10xbf16, #tpu.memory_space<vmem>>, vector<16x10xbf16>
    %85 = arith.truncf %83 : vector<10x160xf32> to vector<10x160xbf16>
    %cst_51 = arith.constant dense<0.000000e+00> : vector<16x160xf32>
    %86 = tpu.matmul %84, %85, %cst_51 {dimension_numbers = #tpu.dot_dimension_numbers<[1], [0], [0], [1], [0, 0, 1, 1], [], []>} : vector<16x10xbf16>, vector<10x160xbf16>, vector<16x160xf32> -> vector<16x160xf32>
    %87 = vector.extract_strided_slice %86 {offsets = [0, 0], sizes = [5, 160], strides = [1, 1]} : vector<16x160xf32> to vector<5x160xf32>
    %88 = vector.extract_strided_slice %86 {offsets = [8, 0], sizes = [5, 160], strides = [1, 1]} : vector<16x160xf32> to vector<5x160xf32>
    %89 = arith.maximumf %87, %88 : vector<5x160xf32>
    %90 = arith.truncf %89 : vector<5x160xf32> to vector<5x160xbf16>
    %c0_52 = arith.constant 0 : index
    %c0_53 = arith.constant 0 : index
    %91 = vector.load %arg9[%c0_52, %c0_53] : memref<160x256xbf16, #tpu.memory_space<vmem>>, vector<160x256xbf16>
    %cst_54 = arith.constant dense<0.000000e+00> : vector<5x256xf32>
    %92 = tpu.matmul %90, %91, %cst_54 {dimension_numbers = #tpu.dot_dimension_numbers<[1], [0], [0], [1], [0, 0, 1, 1], [], []>} : vector<5x160xbf16>, vector<160x256xbf16>, vector<5x256xf32> -> vector<5x256xf32>
    %93 = vector.extract_strided_slice %92 {offsets = [0, 0], sizes = [5, 80], strides = [1, 1]} : vector<5x256xf32> to vector<5x80xf32>
    %94 = vector.extract_strided_slice %92 {offsets = [0, 128], sizes = [5, 80], strides = [1, 1]} : vector<5x256xf32> to vector<5x80xf32>
    %95 = arith.maximumf %93, %94 : vector<5x80xf32>
    %96 = vector.extract_strided_slice %95 {offsets = [0, 0], sizes = [1, 80], strides = [1, 1]} : vector<5x80xf32> to vector<1x80xf32>
    %97 = vector.extract_strided_slice %95 {offsets = [1, 0], sizes = [1, 80], strides = [1, 1]} : vector<5x80xf32> to vector<1x80xf32>
    %98 = vector.extract_strided_slice %95 {offsets = [2, 0], sizes = [1, 80], strides = [1, 1]} : vector<5x80xf32> to vector<1x80xf32>
    %99 = vector.extract_strided_slice %95 {offsets = [3, 0], sizes = [1, 80], strides = [1, 1]} : vector<5x80xf32> to vector<1x80xf32>
    %100 = vector.extract_strided_slice %95 {offsets = [4, 0], sizes = [1, 80], strides = [1, 1]} : vector<5x80xf32> to vector<1x80xf32>
    %101 = tpu.concatenate %96, %97, %98, %99, %100 in 1 : vector<1x80xf32>, vector<1x80xf32>, vector<1x80xf32>, vector<1x80xf32>, vector<1x80xf32> -> vector<1x400xf32>
    %102 = arith.truncf %101 : vector<1x400xf32> to vector<1x400xbf16>
    %c0_55 = arith.constant 0 : index
    %c0_56 = arith.constant 0 : index
    %103 = vector.load %arg10[%c0_55, %c0_56] : memref<400x120xbf16, #tpu.memory_space<vmem>>, vector<400x120xbf16>
    %cst_57 = arith.constant dense<0.000000e+00> : vector<1x120xf32>
    %104 = tpu.matmul %102, %103, %cst_57 {dimension_numbers = #tpu.dot_dimension_numbers<[1], [0], [0], [1], [0, 0, 1, 1], [], []>} : vector<1x400xbf16>, vector<400x120xbf16>, vector<1x120xf32> -> vector<1x120xf32>
    %c0_58 = arith.constant 0 : index
    %c0_59 = arith.constant 0 : index
    %105 = vector.load %arg11[%c0_58, %c0_59] : memref<1x120xf32, #tpu.memory_space<vmem>>, vector<1x120xf32>
    %106 = arith.addf %104, %105 : vector<1x120xf32>
    %cst_60 = arith.constant 0.000000e+00 : f32
    %107 = vector.broadcast %cst_60 : f32 to vector<1x120xf32>
    %108 = arith.maximumf %106, %107 : vector<1x120xf32>
    %109 = arith.truncf %108 : vector<1x120xf32> to vector<1x120xbf16>
    %c0_61 = arith.constant 0 : index
    %c0_62 = arith.constant 0 : index
    %110 = vector.load %arg12[%c0_61, %c0_62] : memref<120x84xbf16, #tpu.memory_space<vmem>>, vector<120x84xbf16>
    %cst_63 = arith.constant dense<0.000000e+00> : vector<1x84xf32>
    %111 = tpu.matmul %109, %110, %cst_63 {dimension_numbers = #tpu.dot_dimension_numbers<[1], [0], [0], [1], [0, 0, 1, 1], [], []>} : vector<1x120xbf16>, vector<120x84xbf16>, vector<1x84xf32> -> vector<1x84xf32>
    %c0_64 = arith.constant 0 : index
    %c0_65 = arith.constant 0 : index
    %112 = vector.load %arg13[%c0_64, %c0_65] : memref<1x84xf32, #tpu.memory_space<vmem>>, vector<1x84xf32>
    %113 = arith.addf %111, %112 : vector<1x84xf32>
    %cst_66 = arith.constant 0.000000e+00 : f32
    %114 = vector.broadcast %cst_66 : f32 to vector<1x84xf32>
    %115 = arith.maximumf %113, %114 : vector<1x84xf32>
    %116 = arith.truncf %115 : vector<1x84xf32> to vector<1x84xbf16>
    %c0_67 = arith.constant 0 : index
    %c0_68 = arith.constant 0 : index
    %117 = vector.load %arg14[%c0_67, %c0_68] : memref<84x2xbf16, #tpu.memory_space<vmem>>, vector<84x2xbf16>
    %cst_69 = arith.constant dense<0.000000e+00> : vector<1x2xf32>
    %118 = tpu.matmul %116, %117, %cst_69 {dimension_numbers = #tpu.dot_dimension_numbers<[1], [0], [0], [1], [0, 0, 1, 1], [], []>} : vector<1x84xbf16>, vector<84x2xbf16>, vector<1x2xf32> -> vector<1x2xf32>
    %c0_70 = arith.constant 0 : index
    %c0_71 = arith.constant 0 : index
    %119 = vector.load %arg15[%c0_70, %c0_71] : memref<1x2xf32, #tpu.memory_space<vmem>>, vector<1x2xf32>
    %120 = arith.addf %118, %119 : vector<1x2xf32>
    %c0_72 = arith.constant 0 : index
    %c0_73 = arith.constant 0 : index
    %c0_74 = arith.constant 0 : index
    %121 = vector.load %arg16[%c0_72, %c0_73, %c0_74] : memref<1x1x2xf32, #tpu.memory_space<vmem>>, vector<1x1x2xf32>
    %122 = vector.shape_cast %121 : vector<1x1x2xf32> to vector<1x2xf32>
    %123 = vector.shape_cast %120 : vector<1x2xf32> to vector<1x1x2xf32>
    tpu.vector_store %arg16[%c0_72, %c0_73, %c0_74], %123 {strides = array<i32>} : memref<1x1x2xf32, #tpu.memory_space<vmem>>, vector<1x1x2xf32>,
    return
  }
  func.func @transform_0(%arg0: i32) -> (i32, i32, i32) {
    %c0_i32 = arith.constant 0 : i32
    %c0_i32_0 = arith.constant 0 : i32
    %c0_i32_1 = arith.constant 0 : i32
    return %arg0, %c0_i32, %c0_i32_0 : i32, i32, i32
  }
  func.func @transform_1(%arg0: i32) -> (i32, i32, i32) {
    %c0_i32 = arith.constant 0 : i32
    %c0_i32_0 = arith.constant 0 : i32
    %c0_i32_1 = arith.constant 0 : i32
    %c0_i32_2 = arith.constant 0 : i32
    return %c0_i32, %c0_i32_0, %c0_i32_1 : i32, i32, i32
  }
  func.func @transform_2(%arg0: i32) -> (i32, i32) {
    %c0_i32 = arith.constant 0 : i32
    %c0_i32_0 = arith.constant 0 : i32
    %c0_i32_1 = arith.constant 0 : i32
    return %c0_i32, %c0_i32_0 : i32, i32
  }
  func.func @transform_3(%arg0: i32) -> (i32, i32) {
    %c0_i32 = arith.constant 0 : i32
    %c0_i32_0 = arith.constant 0 : i32
    %c0_i32_1 = arith.constant 0 : i32
    return %c0_i32, %c0_i32_0 : i32, i32
  }
  func.func @transform_4(%arg0: i32) -> (i32, i32) {
    %c0_i32 = arith.constant 0 : i32
    %c0_i32_0 = arith.constant 0 : i32
    %c0_i32_1 = arith.constant 0 : i32
    return %c0_i32, %c0_i32_0 : i32, i32
  }
  func.func @transform_5(%arg0: i32) -> (i32, i32, i32) {
    %c0_i32 = arith.constant 0 : i32
    %c0_i32_0 = arith.constant 0 : i32
    %c0_i32_1 = arith.constant 0 : i32
    %c0_i32_2 = arith.constant 0 : i32
    return %c0_i32, %c0_i32_0, %c0_i32_1 : i32, i32, i32
  }
  func.func @transform_6(%arg0: i32) -> (i32, i32) {
    %c0_i32 = arith.constant 0 : i32
    %c0_i32_0 = arith.constant 0 : i32
    %c0_i32_1 = arith.constant 0 : i32
    return %c0_i32, %c0_i32_0 : i32, i32
  }
  func.func @transform_7(%arg0: i32) -> (i32, i32) {
    %c0_i32 = arith.constant 0 : i32
    %c0_i32_0 = arith.constant 0 : i32
    %c0_i32_1 = arith.constant 0 : i32
    return %c0_i32, %c0_i32_0 : i32, i32
  }
  func.func @transform_8(%arg0: i32) -> (i32, i32) {
    %c0_i32 = arith.constant 0 : i32
    %c0_i32_0 = arith.constant 0 : i32
    %c0_i32_1 = arith.constant 0 : i32
    return %c0_i32, %c0_i32_0 : i32, i32
  }
  func.func @transform_9(%arg0: i32) -> (i32, i32) {
    %c0_i32 = arith.constant 0 : i32
    %c0_i32_0 = arith.constant 0 : i32
    %c0_i32_1 = arith.constant 0 : i32
    return %c0_i32, %c0_i32_0 : i32, i32
  }
  func.func @transform_10(%arg0: i32) -> (i32, i32) {
    %c0_i32 = arith.constant 0 : i32
    %c0_i32_0 = arith.constant 0 : i32
    %c0_i32_1 = arith.constant 0 : i32
    return %c0_i32, %c0_i32_0 : i32, i32
  }
  func.func @transform_11(%arg0: i32) -> (i32, i32) {
    %c0_i32 = arith.constant 0 : i32
    %c0_i32_0 = arith.constant 0 : i32
    %c0_i32_1 = arith.constant 0 : i32
    return %c0_i32, %c0_i32_0 : i32, i32
  }
  func.func @transform_12(%arg0: i32) -> (i32, i32) {
    %c0_i32 = arith.constant 0 : i32
    %c0_i32_0 = arith.constant 0 : i32
    %c0_i32_1 = arith.constant 0 : i32
    return %c0_i32, %c0_i32_0 : i32, i32
  }
  func.func @transform_13(%arg0: i32) -> (i32, i32) {
    %c0_i32 = arith.constant 0 : i32
    %c0_i32_0 = arith.constant 0 : i32
    %c0_i32_1 = arith.constant 0 : i32
    return %c0_i32, %c0_i32_0 : i32, i32
  }
  func.func @transform_14(%arg0: i32) -> (i32, i32) {
    %c0_i32 = arith.constant 0 : i32
    %c0_i32_0 = arith.constant 0 : i32
    %c0_i32_1 = arith.constant 0 : i32
    return %c0_i32, %c0_i32_0 : i32, i32
  }
  func.func @transform_15(%arg0: i32) -> (i32, i32, i32) {
    %c0_i32 = arith.constant 0 : i32
    %c0_i32_0 = arith.constant 0 : i32
    %c0_i32_1 = arith.constant 0 : i32
    return %arg0, %c0_i32, %c0_i32_0 : i32, i32, i32
  }
}

</mosaic_0001>

<llo_original>
// kernel: net_forward.1
$region0: #{net_forward.1}
  #allocation0 [shape = 'u32[]', space=smem, size = 0x4, offset = 0x4, fixed_abs, tag = 'smem constant byte address 0x4 - core index']
  #allocation1 [shape = 'u32[144,128]{1,0:T(1,128)}', space=vmem, size = 0x12000, scoped, tag = 'internal scratch']
  %s0 = inlined_call_operand.vmem [shape: f32[2,32,96], index: 0, kind: input, shape index: {}]
  %s1 = inlined_call_operand.vmem [shape: bf16[5,96,168], index: 1, kind: input, shape index: {}]
  %s2 = inlined_call_operand.vmem [shape: f32[1,168], index: 2, kind: input, shape index: {}]
  %s3 = inlined_call_operand.vmem [shape: bf16[32,28], index: 3, kind: input, shape index: {}]
  %s4 = inlined_call_operand.vmem [shape: bf16[168,256], index: 4, kind: input, shape index: {}]
  %s5 = inlined_call_operand.vmem [shape: bf16[5,84,160], index: 5, kind: input, shape index: {}]
  %s6 = inlined_call_operand.vmem [shape: f32[1,160], index: 6, kind: input, shape index: {}]
  %s7 = inlined_call_operand.vmem [shape: bf16[16,10], index: 7, kind: input, shape index: {}]
  %s8 = inlined_call_operand.vmem [shape: bf16[160,256], index: 8, kind: input, shape index: {}]
  %s9 = inlined_call_operand.vmem [shape: bf16[400,120], index: 9, kind: input, shape index: {}]
  %s10 = inlined_call_operand.vmem [shape: f32[1,120], index: 10, kind: input, shape index: {}]
  %s11 = inlined_call_operand.vmem [shape: bf16[120,84], index: 11, kind: input, shape index: {}]
  %s12 = inlined_call_operand.vmem [shape: f32[1,84], index: 12, kind: input, shape index: {}]
  %s13 = inlined_call_operand.vmem [shape: bf16[84,2], index: 13, kind: input, shape index: {}]
  %s14 = inlined_call_operand.vmem [shape: f32[1,2], index: 14, kind: input, shape index: {}]
  %s15 = inlined_call_operand.hbm [shape: f32[2,1,2], index: 15, kind: output, shape index: {}]
  %s16 = sld [smem:[#allocation0]]
  $region93: #{net_forward.1} parent=0
    _
  %s18 = ssub.s32 1, %s16
  %s19 = scalar_select 0, %s18, %s16
  $region1: #{net_forward.1} parent=0
    #allocation2 [shape = 'u8[1024]{0}', space=vmem, size = 0x400, scoped, tag = 'output window, operand 0']
    #allocation3 [shape = 's32[2]{0}', space=sflag, size = 0x8, scoped, tag = 'scoped memory for net_forward.1']
    %20 = vsyncpa [#allocation3], 0
    %s21 = scalar_lea.sflag [#allocation3], 1
    %22 = vsyncpa %s21, 0
    loop: start=0, step=1, limit=4
    $region2: #{net_forward.1} parent=1 // loop_pre_header
      _
    $region3: #{net_forward.1} parent=1 // loop_header
      %s24 = sphi 0, %s28
      %p25 = scmp.ge.s32.totalorder %s24, 4
      %s34 = sphi 0, %s36
      %s37 = sphi 0, %s34
      %s38 = sphi 0, %s37
      %s54 = sphi 0, %s38
      %s58 = sphi 0, %s58
      %s60 = sphi 0, %s58
      %s61 = sphi 0, %s60
      %s75 = sphi 0, %s61
      %s79 = sphi 0, %s79
      %s81 = sphi 0, %s79
      %s82 = sphi 0, %s81
      %s96 = sphi 0, %s82
      %s100 = sphi 0, %s100
      %s102 = sphi 0, %s100
      %s103 = sphi 0, %s102
      %s117 = sphi 0, %s103
      %s121 = sphi 0, %s121
      %s123 = sphi 0, %s121
      %s124 = sphi 0, %s123
      %s138 = sphi 0, %s124
      %s142 = sphi 0, %s142
      %s144 = sphi 0, %s142
      %s145 = sphi 0, %s144
      %s159 = sphi 0, %s145
      %s163 = sphi 0, %s163
      %s165 = sphi 0, %s163
      %s166 = sphi 0, %s165
      %s180 = sphi 0, %s166
      %s184 = sphi 0, %s184
      %s186 = sphi 0, %s184
      %s187 = sphi 0, %s186
      %s201 = sphi 0, %s187
      %s205 = sphi 0, %s205
      %s207 = sphi 0, %s205
      %s208 = sphi 0, %s207
      %s222 = sphi 0, %s208
      %s226 = sphi 0, %s226
      %s228 = sphi 0, %s226
      %s229 = sphi 0, %s228
      %s243 = sphi 0, %s229
      %s247 = sphi 0, %s247
      %s249 = sphi 0, %s247
      %s250 = sphi 0, %s249
      %s264 = sphi 0, %s250
      %s268 = sphi 0, %s268
      %s270 = sphi 0, %s268
      %s271 = sphi 0, %s270
      %s285 = sphi 0, %s271
      %s289 = sphi 0, %s289
      %s291 = sphi 0, %s289
      %s292 = sphi 0, %s291
      %s306 = sphi 0, %s292
      %s310 = sphi 0, %s310
      %s312 = sphi 0, %s310
      %s313 = sphi 0, %s312
      %s327 = sphi 0, %s313
      %s331 = sphi 0, %s331
      %s333 = sphi 0, %s331
      %s334 = sphi 0, %s333
      %s348 = sphi 0, %s334
      %s354 = sphi 0, %s356
      %s357 = sphi 0, %s354
      %s358 = sphi 0, %s357
      %s374 = sphi 0, %s358
    $region4: #{net_forward.1} parent=1 // loop_header_branch
      %27 = sbr.rel (%p25) target = $region8
    $region5: #{net_forward.1} parent=1 // loop_body
      %s29 = ssub.s32 %s24, 1
      %s30 = ssub.s32 %s24, 2
      %s31 = sadd.s32 %s24, 1
      %s32 = ssub.s32 %s24, %s31
      %p33 = scmp.eq.s32.totalorder %s32, 0
      %s35 = sadd.s32 %s34, 1
      %s36 = scalar_select %p33, %s34, %s35
      %p39 = pneg %p33
      %p40 = scmp.eq.s32.totalorder %s24, 1
      %p41 = por %p39, %p40
      %p42 = scmp.ne.s32.totalorder %s34, %s37
      %p43 = scmp.eq.s32.totalorder %s24, 0
      %p44 = por %p42, %p43
      %p45 = scmp.ne.s32.totalorder %s34, %s37
      %p46 = scmp.eq.s32.totalorder %s29, 1
      %p47 = por %p45, %p46
      %p48 = scmp.ne.s32.totalorder %s37, %s38
      %p49 = scmp.eq.s32.totalorder %s29, 0
      %p50 = por %p48, %p49
      %p51 = scmp.ne.s32.totalorder %s37, %s38
      %p52 = scmp.eq.s32.totalorder %s30, 1
      %p53 = por %p51, %p52
      %p55 = scmp.ne.s32.totalorder %s38, %s54
      %p56 = scmp.eq.s32.totalorder %s30, 0
      %p57 = por %p55, %p56
      %s59 = sadd.s32 %s58, 1
      %p62 = scmp.eq.s32.totalorder %s24, 1
      %p63 = scmp.ne.s32.totalorder %s58, %s60
      %p64 = scmp.eq.s32.totalorder %s24, 0
      %p65 = por %p63, %p64
      %p66 = scmp.ne.s32.totalorder %s58, %s60
      %p67 = scmp.eq.s32.totalorder %s29, 1
      %p68 = por %p66, %p67
      %p69 = scmp.ne.s32.totalorder %s60, %s61
      %p70 = scmp.eq.s32.totalorder %s29, 0
      %p71 = por %p69, %p70
      %p72 = scmp.ne.s32.totalorder %s60, %s61
      %p73 = scmp.eq.s32.totalorder %s30, 1
      %p74 = por %p72, %p73
      %p76 = scmp.ne.s32.totalorder %s61, %s75
      %p77 = scmp.eq.s32.totalorder %s30, 0
      %p78 = por %p76, %p77
      %s80 = sadd.s32 %s79, 1
      %p83 = scmp.eq.s32.totalorder %s24, 1
      %p84 = scmp.ne.s32.totalorder %s79, %s81
      %p85 = scmp.eq.s32.totalorder %s24, 0
      %p86 = por %p84, %p85
      %p87 = scmp.ne.s32.totalorder %s79, %s81
      %p88 = scmp.eq.s32.totalorder %s29, 1
      %p89 = por %p87, %p88
      %p90 = scmp.ne.s32.totalorder %s81, %s82
      %p91 = scmp.eq.s32.totalorder %s29, 0
      %p92 = por %p90, %p91
      %p93 = scmp.ne.s32.totalorder %s81, %s82
      %p94 = scmp.eq.s32.totalorder %s30, 1
      %p95 = por %p93, %p94
      %p97 = scmp.ne.s32.totalorder %s82, %s96
      %p98 = scmp.eq.s32.totalorder %s30, 0
      %p99 = por %p97, %p98
      %s101 = sadd.s32 %s100, 1
      %p104 = scmp.eq.s32.totalorder %s24, 1
      %p105 = scmp.ne.s32.totalorder %s100, %s102
      %p106 = scmp.eq.s32.totalorder %s24, 0
      %p107 = por %p105, %p106
      %p108 = scmp.ne.s32.totalorder %s100, %s102
      %p109 = scmp.eq.s32.totalorder %s29, 1
      %p110 = por %p108, %p109
      %p111 = scmp.ne.s32.totalorder %s102, %s103
      %p112 = scmp.eq.s32.totalorder %s29, 0
      %p113 = por %p111, %p112
      %p114 = scmp.ne.s32.totalorder %s102, %s103
      %p115 = scmp.eq.s32.totalorder %s30, 1
      %p116 = por %p114, %p115
      %p118 = scmp.ne.s32.totalorder %s103, %s117
      %p119 = scmp.eq.s32.totalorder %s30, 0
      %p120 = por %p118, %p119
      %s122 = sadd.s32 %s121, 1
      %p125 = scmp.eq.s32.totalorder %s24, 1
      %p126 = scmp.ne.s32.totalorder %s121, %s123
      %p127 = scmp.eq.s32.totalorder %s24, 0
      %p128 = por %p126, %p127
      %p129 = scmp.ne.s32.totalorder %s121, %s123
      %p130 = scmp.eq.s32.totalorder %s29, 1
      %p131 = por %p129, %p130
      %p132 = scmp.ne.s32.totalorder %s123, %s124
      %p133 = scmp.eq.s32.totalorder %s29, 0
      %p134 = por %p132, %p133
      %p135 = scmp.ne.s32.totalorder %s123, %s124
      %p136 = scmp.eq.s32.totalorder %s30, 1
      %p137 = por %p135, %p136
      %p139 = scmp.ne.s32.totalorder %s124, %s138
      %p140 = scmp.eq.s32.totalorder %s30, 0
      %p141 = por %p139, %p140
      %s143 = sadd.s32 %s142, 1
      %p146 = scmp.eq.s32.totalorder %s24, 1
      %p147 = scmp.ne.s32.totalorder %s142, %s144
      %p148 = scmp.eq.s32.totalorder %s24, 0
      %p149 = por %p147, %p148
      %p150 = scmp.ne.s32.totalorder %s142, %s144
      %p151 = scmp.eq.s32.totalorder %s29, 1
      %p152 = por %p150, %p151
      %p153 = scmp.ne.s32.totalorder %s144, %s145
      %p154 = scmp.eq.s32.totalorder %s29, 0
      %p155 = por %p153, %p154
      %p156 = scmp.ne.s32.totalorder %s144, %s145
      %p157 = scmp.eq.s32.totalorder %s30, 1
      %p158 = por %p156, %p157
      %p160 = scmp.ne.s32.totalorder %s145, %s159
      %p161 = scmp.eq.s32.totalorder %s30, 0
      %p162 = por %p160, %p161
      %s164 = sadd.s32 %s163, 1
      %p167 = scmp.eq.s32.totalorder %s24, 1
      %p168 = scmp.ne.s32.totalorder %s163, %s165
      %p169 = scmp.eq.s32.totalorder %s24, 0
      %p170 = por %p168, %p169
      %p171 = scmp.ne.s32.totalorder %s163, %s165
      %p172 = scmp.eq.s32.totalorder %s29, 1
      %p173 = por %p171, %p172
      %p174 = scmp.ne.s32.totalorder %s165, %s166
      %p175 = scmp.eq.s32.totalorder %s29, 0
      %p176 = por %p174, %p175
      %p177 = scmp.ne.s32.totalorder %s165, %s166
      %p178 = scmp.eq.s32.totalorder %s30, 1
      %p179 = por %p177, %p178
      %p181 = scmp.ne.s32.totalorder %s166, %s180
      %p182 = scmp.eq.s32.totalorder %s30, 0
      %p183 = por %p181, %p182
      %s185 = sadd.s32 %s184, 1
      %p188 = scmp.eq.s32.totalorder %s24, 1
      %p189 = scmp.ne.s32.totalorder %s184, %s186
      %p190 = scmp.eq.s32.totalorder %s24, 0
      %p191 = por %p189, %p190
      %p192 = scmp.ne.s32.totalorder %s184, %s186
      %p193 = scmp.eq.s32.totalorder %s29, 1
      %p194 = por %p192, %p193
      %p195 = scmp.ne.s32.totalorder %s186, %s187
      %p196 = scmp.eq.s32.totalorder %s29, 0
      %p197 = por %p195, %p196
      %p198 = scmp.ne.s32.totalorder %s186, %s187
      %p199 = scmp.eq.s32.totalorder %s30, 1
      %p200 = por %p198, %p199
      %p202 = scmp.ne.s32.totalorder %s187, %s201
      %p203 = scmp.eq.s32.totalorder %s30, 0
      %p204 = por %p202, %p203
      %s206 = sadd.s32 %s205, 1
      %p209 = scmp.eq.s32.totalorder %s24, 1
      %p210 = scmp.ne.s32.totalorder %s205, %s207
      %p211 = scmp.eq.s32.totalorder %s24, 0
      %p212 = por %p210, %p211
      %p213 = scmp.ne.s32.totalorder %s205, %s207
      %p214 = scmp.eq.s32.totalorder %s29, 1
      %p215 = por %p213, %p214
      %p216 = scmp.ne.s32.totalorder %s207, %s208
      %p217 = scmp.eq.s32.totalorder %s29, 0
      %p218 = por %p216, %p217
      %p219 = scmp.ne.s32.totalorder %s207, %s208
      %p220 = scmp.eq.s32.totalorder %s30, 1
      %p221 = por %p219, %p220
      %p223 = scmp.ne.s32.totalorder %s208, %s222
      %p224 = scmp.eq.s32.totalorder %s30, 0
      %p225 = por %p223, %p224
      %s227 = sadd.s32 %s226, 1
      %p230 = scmp.eq.s32.totalorder %s24, 1
      %p231 = scmp.ne.s32.totalorder %s226, %s228
      %p232 = scmp.eq.s32.totalorder %s24, 0
      %p233 = por %p231, %p232
      %p234 = scmp.ne.s32.totalorder %s226, %s228
      %p235 = scmp.eq.s32.totalorder %s29, 1
      %p236 = por %p234, %p235
      %p237 = scmp.ne.s32.totalorder %s228, %s229
      %p238 = scmp.eq.s32.totalorder %s29, 0
      %p239 = por %p237, %p238
      %p240 = scmp.ne.s32.totalorder %s228, %s229
      %p241 = scmp.eq.s32.totalorder %s30, 1
      %p242 = por %p240, %p241
      %p244 = scmp.ne.s32.totalorder %s229, %s243
      %p245 = scmp.eq.s32.totalorder %s30, 0
      %p246 = por %p244, %p245
      %s248 = sadd.s32 %s247, 1
      %p251 = scmp.eq.s32.totalorder %s24, 1
      %p252 = scmp.ne.s32.totalorder %s247, %s249
      %p253 = scmp.eq.s32.totalorder %s24, 0
      %p254 = por %p252, %p253
      %p255 = scmp.ne.s32.totalorder %s247, %s249
      %p256 = scmp.eq.s32.totalorder %s29, 1
      %p257 = por %p255, %p256
      %p258 = scmp.ne.s32.totalorder %s249, %s250
      %p259 = scmp.eq.s32.totalorder %s29, 0
      %p260 = por %p258, %p259
      %p261 = scmp.ne.s32.totalorder %s249, %s250
      %p262 = scmp.eq.s32.totalorder %s30, 1
      %p263 = por %p261, %p262
      %p265 = scmp.ne.s32.totalorder %s250, %s264
      %p266 = scmp.eq.s32.totalorder %s30, 0
      %p267 = por %p265, %p266
      %s269 = sadd.s32 %s268, 1
      %p272 = scmp.eq.s32.totalorder %s24, 1
      %p273 = scmp.ne.s32.totalorder %s268, %s270
      %p274 = scmp.eq.s32.totalorder %s24, 0
      %p275 = por %p273, %p274
      %p276 = scmp.ne.s32.totalorder %s268, %s270
      %p277 = scmp.eq.s32.totalorder %s29, 1
      %p278 = por %p276, %p277
      %p279 = scmp.ne.s32.totalorder %s270, %s271
      %p280 = scmp.eq.s32.totalorder %s29, 0
      %p281 = por %p279, %p280
      %p282 = scmp.ne.s32.totalorder %s270, %s271
      %p283 = scmp.eq.s32.totalorder %s30, 1
      %p284 = por %p282, %p283
      %p286 = scmp.ne.s32.totalorder %s271, %s285
      %p287 = scmp.eq.s32.totalorder %s30, 0
      %p288 = por %p286, %p287
      %s290 = sadd.s32 %s289, 1
      %p293 = scmp.eq.s32.totalorder %s24, 1
      %p294 = scmp.ne.s32.totalorder %s289, %s291
      %p295 = scmp.eq.s32.totalorder %s24, 0
      %p296 = por %p294, %p295
      %p297 = scmp.ne.s32.totalorder %s289, %s291
      %p298 = scmp.eq.s32.totalorder %s29, 1
      %p299 = por %p297, %p298
      %p300 = scmp.ne.s32.totalorder %s291, %s292
      %p301 = scmp.eq.s32.totalorder %s29, 0
      %p302 = por %p300, %p301
      %p303 = scmp.ne.s32.totalorder %s291, %s292
      %p304 = scmp.eq.s32.totalorder %s30, 1
      %p305 = por %p303, %p304
      %p307 = scmp.ne.s32.totalorder %s292, %s306
      %p308 = scmp.eq.s32.totalorder %s30, 0
      %p309 = por %p307, %p308
      %s311 = sadd.s32 %s310, 1
      %p314 = scmp.eq.s32.totalorder %s24, 1
      %p315 = scmp.ne.s32.totalorder %s310, %s312
      %p316 = scmp.eq.s32.totalorder %s24, 0
      %p317 = por %p315, %p316
      %p318 = scmp.ne.s32.totalorder %s310, %s312
      %p319 = scmp.eq.s32.totalorder %s29, 1
      %p320 = por %p318, %p319
      %p321 = scmp.ne.s32.totalorder %s312, %s313
      %p322 = scmp.eq.s32.totalorder %s29, 0
      %p323 = por %p321, %p322
      %p324 = scmp.ne.s32.totalorder %s312, %s313
      %p325 = scmp.eq.s32.totalorder %s30, 1
      %p326 = por %p324, %p325
      %p328 = scmp.ne.s32.totalorder %s313, %s327
      %p329 = scmp.eq.s32.totalorder %s30, 0
      %p330 = por %p328, %p329
      %s332 = sadd.s32 %s331, 1
      %p335 = scmp.eq.s32.totalorder %s24, 1
      %p336 = scmp.ne.s32.totalorder %s331, %s333
      %p337 = scmp.eq.s32.totalorder %s24, 0
      %p338 = por %p336, %p337
      %p339 = scmp.ne.s32.totalorder %s331, %s333
      %p340 = scmp.eq.s32.totalorder %s29, 1
      %p341 = por %p339, %p340
      %p342 = scmp.ne.s32.totalorder %s333, %s334
      %p343 = scmp.eq.s32.totalorder %s29, 0
      %p344 = por %p342, %p343
      %p345 = scmp.ne.s32.totalorder %s333, %s334
      %p346 = scmp.eq.s32.totalorder %s30, 1
      %p347 = por %p345, %p346
      %p349 = scmp.ne.s32.totalorder %s334, %s348
      %p350 = scmp.eq.s32.totalorder %s30, 0
      %p351 = por %p349, %p350
      %s352 = ssub.s32 %s24, %s31
      %p353 = scmp.eq.s32.totalorder %s352, 0
      %s355 = sadd.s32 %s354, 1
      %s356 = scalar_select %p353, %s354, %s355
      %p359 = pneg %p353
      %p360 = scmp.eq.s32.totalorder %s24, 1
      %p361 = por %p359, %p360
      %p362 = scmp.ne.s32.totalorder %s354, %s357
      %p363 = scmp.eq.s32.totalorder %s24, 0
      %p364 = por %p362, %p363
      %p365 = scmp.ne.s32.totalorder %s354, %s357
      %p366 = scmp.eq.s32.totalorder %s29, 1
      %p367 = por %p365, %p366
      %p368 = scmp.ne.s32.totalorder %s357, %s358
      %p369 = scmp.eq.s32.totalorder %s29, 0
      %p370 = por %p368, %p369
      %p371 = scmp.ne.s32.totalorder %s357, %s358
      %p372 = scmp.eq.s32.totalorder %s30, 1
      %p373 = por %p371, %p372
      %p375 = scmp.ne.s32.totalorder %s358, %s374
      %p376 = scmp.eq.s32.totalorder %s30, 0
      %p377 = por %p375, %p376
      %p378 = scmp.le.s32.totalorder 1, %s24
      %p379 = scmp.lt.s32.totalorder %s24, 3
      %p380 = pnand %p378, %p379
      %p381 = pneg %p380
      // Predicated region
      $region9: #{net_forward.1} parent=5 // pred_check
        _
      $region10: #{net_forward.1} parent=5 // pred_check_branch
        %383 = sbr.rel (%p380) target = $region12
      $region11: #{net_forward.1} parent=5 // pred_region
        %s384 = ssub.s32 %s24, 1
        // Predicated region
        $region13: #{net_forward.1} parent=11 // pred_check
          %p385 = pneg %p71
        $region14: #{net_forward.1} parent=11 // pred_check_branch
          %387 = sbr.rel (%p385) target = $region16
        $region15: #{net_forward.1} parent=11 // pred_region
          _
        $region16: #{net_forward.1} parent=11 // pred_fallthru
          _
        // Predicated region
        $region17: #{net_forward.1} parent=11 // pred_check
          %p388 = pneg %p92
        $region18: #{net_forward.1} parent=11 // pred_check_branch
          %390 = sbr.rel (%p388) target = $region20
        $region19: #{net_forward.1} parent=11 // pred_region
          _
        $region20: #{net_forward.1} parent=11 // pred_fallthru
          _
        // Predicated region
        $region21: #{net_forward.1} parent=11 // pred_check
          %p391 = pneg %p113
        $region22: #{net_forward.1} parent=11 // pred_check_branch
          %393 = sbr.rel (%p391) target = $region24
        $region23: #{net_forward.1} parent=11 // pred_region
          _
        $region24: #{net_forward.1} parent=11 // pred_fallthru
          _
        // Predicated region
        $region25: #{net_forward.1} parent=11 // pred_check
          %p394 = pneg %p134
        $region26: #{net_forward.1} parent=11 // pred_check_branch
          %396 = sbr.rel (%p394) target = $region28
        $region27: #{net_forward.1} parent=11 // pred_region
          _
        $region28: #{net_forward.1} parent=11 // pred_fallthru
          _
        // Predicated region
        $region29: #{net_forward.1} parent=11 // pred_check
          %p397 = pneg %p155
        $region30: #{net_forward.1} parent=11 // pred_check_branch
          %399 = sbr.rel (%p397) target = $region32
        $region31: #{net_forward.1} parent=11 // pred_region
          _
        $region32: #{net_forward.1} parent=11 // pred_fallthru
          _
        // Predicated region
        $region33: #{net_forward.1} parent=11 // pred_check
          %p400 = pneg %p176
        $region34: #{net_forward.1} parent=11 // pred_check_branch
          %402 = sbr.rel (%p400) target = $region36
        $region35: #{net_forward.1} parent=11 // pred_region
          _
        $region36: #{net_forward.1} parent=11 // pred_fallthru
          _
        // Predicated region
        $region37: #{net_forward.1} parent=11 // pred_check
          %p403 = pneg %p197
        $region38: #{net_forward.1} parent=11 // pred_check_branch
          %405 = sbr.rel (%p403) target = $region40
        $region39: #{net_forward.1} parent=11 // pred_region
          _
        $region40: #{net_forward.1} parent=11 // pred_fallthru
          _
        // Predicated region
        $region41: #{net_forward.1} parent=11 // pred_check
          %p406 = pneg %p218
        $region42: #{net_forward.1} parent=11 // pred_check_branch
          %408 = sbr.rel (%p406) target = $region44
        $region43: #{net_forward.1} parent=11 // pred_region
          _
        $region44: #{net_forward.1} parent=11 // pred_fallthru
          _
        // Predicated region
        $region45: #{net_forward.1} parent=11 // pred_check
          %p409 = pneg %p239
        $region46: #{net_forward.1} parent=11 // pred_check_branch
          %411 = sbr.rel (%p409) target = $region48
        $region47: #{net_forward.1} parent=11 // pred_region
          _
        $region48: #{net_forward.1} parent=11 // pred_fallthru
          _
        // Predicated region
        $region49: #{net_forward.1} parent=11 // pred_check
          %p412 = pneg %p260
        $region50: #{net_forward.1} parent=11 // pred_check_branch
          %414 = sbr.rel (%p412) target = $region52
        $region51: #{net_forward.1} parent=11 // pred_region
          _
        $region52: #{net_forward.1} parent=11 // pred_fallthru
          _
        // Predicated region
        $region53: #{net_forward.1} parent=11 // pred_check
          %p415 = pneg %p281
        $region54: #{net_forward.1} parent=11 // pred_check_branch
          %417 = sbr.rel (%p415) target = $region56
        $region55: #{net_forward.1} parent=11 // pred_region
          _
        $region56: #{net_forward.1} parent=11 // pred_fallthru
          _
        // Predicated region
        $region57: #{net_forward.1} parent=11 // pred_check
          %p418 = pneg %p302
        $region58: #{net_forward.1} parent=11 // pred_check_branch
          %420 = sbr.rel (%p418) target = $region60
        $region59: #{net_forward.1} parent=11 // pred_region
          _
        $region60: #{net_forward.1} parent=11 // pred_fallthru
          _
        // Predicated region
        $region61: #{net_forward.1} parent=11 // pred_check
          %p421 = pneg %p323
        $region62: #{net_forward.1} parent=11 // pred_check_branch
          %423 = sbr.rel (%p421) target = $region64
        $region63: #{net_forward.1} parent=11 // pred_region
          _
        $region64: #{net_forward.1} parent=11 // pred_fallthru
          _
        // Predicated region
        $region65: #{net_forward.1} parent=11 // pred_check
          %p424 = pneg %p344
        $region66: #{net_forward.1} parent=11 // pred_check_branch
          %426 = sbr.rel (%p424) target = $region68
        $region67: #{net_forward.1} parent=11 // pred_region
          _
        $region68: #{net_forward.1} parent=11 // pred_fallthru
          _
      $region12: #{net_forward.1} parent=5 // pred_fallthru
        _
      %p427 = scmp.lt.s32.totalorder %s24, 2
      // Predicated region
      $region69: #{net_forward.1} parent=5 // pred_check
        %p428 = pneg %p427
      $region70: #{net_forward.1} parent=5 // pred_check_branch
        %430 = sbr.rel (%p428) target = $region72
      $region71: #{net_forward.1} parent=5 // pred_region
        // Predicated region
        $region73: #{net_forward.1} parent=71 // pred_check
          %p431 = pneg %p44
        $region74: #{net_forward.1} parent=71 // pred_check_branch
          %433 = sbr.rel (%p431) target = $region76
        $region75: #{net_forward.1} parent=71 // pred_region
          %p434 = scmp.lt.s32.totalorder %s24, 1
          %s435 = scalar_select %p434, %s24, 1
          %s436 = smul.addr %s435, 4
          %s437 = smul.addr %s436, 8
          %s438 = scalar_lea.vmem %s0, %s437
        $region76: #{net_forward.1} parent=71 // pred_fallthru
          _
      $region72: #{net_forward.1} parent=5 // pred_fallthru
        _
      %p439 = scmp.le.s32.totalorder 1, %s24
      %p440 = scmp.lt.s32.totalorder %s24, 3
      %p441 = pnand %p439, %p440
      %p442 = pneg %p441
      // Predicated region
      $region77: #{net_forward.1} parent=5 // pred_check
        _
      $region78: #{net_forward.1} parent=5 // pred_check_branch
        %444 = sbr.rel (%p441) target = $region80
      $region79: #{net_forward.1} parent=5 // pred_region
        %s445 = ssub.s32 %s24, 1
        %p446 = scmp.lt.s32.totalorder %s29, 1
        %s447 = scalar_select %p446, %s29, 1
        %s448 = smul.addr %s447, 4
        %s449 = smul.addr %s448, 8
        %s450 = scalar_lea.vmem %s0, %s449
        %p451 = pneg %p50
        %p452 = pneg %p47
        %p453 = pneg %p71
        %p454 = pneg %p68
        %p455 = pneg %p92
        %p456 = pneg %p89
        %p457 = pneg %p113
        %p458 = pneg %p110
        %p459 = pneg %p134
        %p460 = pneg %p131
        %p461 = pneg %p155
        %p462 = pneg %p152
        %p463 = pneg %p176
        %p464 = pneg %p173
        %p465 = pneg %p197
        %p466 = pneg %p194
        %p467 = pneg %p218
        %p468 = pneg %p215
        %p469 = pneg %p239
        %p470 = pneg %p236
        %p471 = pneg %p260
        %p472 = pneg %p257
        %p473 = pneg %p281
        %p474 = pneg %p278
        %p475 = pneg %p302
        %p476 = pneg %p299
        %p477 = pneg %p323
        %p478 = pneg %p320
        %p479 = pneg %p344
        %p480 = pneg %p341
        %p481 = pneg %p370
        %p482 = pneg %p367
        %s483 = sand.u32 %s357, 1
        %s484 = scalar_lea.sflag [#allocation3], %s483
        %s485 = sand.u32 %s357, 1
        %s486 = scalar_lea.vmem [#allocation2], %s485
        %p487 = scmp.lt.s32.totalorder %s29, 1
        %s488 = scalar_select %p487, %s29, 1
        %s489 = smul.addr %s488, 4
        %s490 = smul.addr %s489, 8
        %s491 = scalar_lea.vmem %s0, %s490
        %v493 = vld [vmem:[%s491] sm:$0xff]
        %v494 = vld [vmem:[%s491 + $0x8] sm:$0xff]
        %v495 = vld [vmem:[%s491 + $0x10] sm:$0xff]
        %v496 = vld [vmem:[%s491 + $0x18] sm:$0xff]
        %v497 = vld [vmem:[%s2] sm:$0x3]
        %v499 = vlaneseq
        %v500 = vshrl.u32 %v499, 7
        %v501 = vsub.s32 0, %v500
        %v502 = vrot.slane %v497, %v501
        %v503 = vlaneseq
        %v504 = vshrl.u32 %v503, 7
        %v505 = vsub.s32 1, %v504
        %v506 = vrot.slane %v497, %v505
        %v509 = vpack.c.bf16 %v494, %v493
        %v510 = vpack.c.bf16 %v496, %v495
        %v511 = vld [vmem:[%s1] sm:$0xff]
        %v512 = vld [vmem:[%s1 + $0x8] sm:$0xff]
        %v513 = vld [vmem:[%s1 + $0x10] sm:$0xff]
        %v514 = vld [vmem:[%s1 + $0x18] sm:$0xff]
        %v515 = vld [vmem:[%s1 + $0x20] sm:$0xff]
        %v516 = vld [vmem:[%s1 + $0x28] sm:$0xff]
        %v517 = vld [vmem:[%s1 + $0x30] sm:$0xff]
        %v518 = vld [vmem:[%s1 + $0x38] sm:$0xff]
        %v519 = vld [vmem:[%s1 + $0x40] sm:$0xff]
        %v520 = vld [vmem:[%s1 + $0x48] sm:$0xff]
        %v521 = vld [vmem:[%s1 + $0x50] sm:$0xff]
        %v522 = vld [vmem:[%s1 + $0x58] sm:$0xff]
        %v535 = vunpack.c.l.b16 %v511
        %v536 = vunpack.c.h.b16 %v511
        %v537 = vunpack.c.l.b16 %v512
        %v538 = vunpack.c.h.b16 %v512
        %v539 = vunpack.c.l.b16 %v513
        %v540 = vunpack.c.h.b16 %v513
        %v541 = vunpack.c.l.b16 %v514
        %v542 = vunpack.c.h.b16 %v514
        %v543 = vunpack.c.l.b16 %v515
        %v544 = vunpack.c.h.b16 %v515
        %v545 = vunpack.c.l.b16 %v516
        %v546 = vunpack.c.h.b16 %v516
        %v547 = vunpack.c.l.b16 %v517
        %v548 = vunpack.c.h.b16 %v517
        %v549 = vunpack.c.l.b16 %v518
        %v550 = vunpack.c.h.b16 %v518
        %v551 = vunpack.c.l.b16 %v519
        %v552 = vunpack.c.h.b16 %v519
        %v553 = vunpack.c.l.b16 %v520
        %v554 = vunpack.c.h.b16 %v520
        %v555 = vunpack.c.l.b16 %v521
        %v556 = vunpack.c.h.b16 %v521
        %v557 = vunpack.c.l.b16 %v522
        %v558 = vunpack.c.h.b16 %v522
        %v559 = vpack.c.b16 %v537, %v535
        %v560 = vpack.c.b16 %v538, %v536
        %v561 = vpack.c.b16 %v541, %v539
        %v562 = vpack.c.b16 %v542, %v540
        %v563 = vpack.c.b16 %v545, %v543
        %v564 = vpack.c.b16 %v546, %v544
        %v565 = vpack.c.b16 %v549, %v547
        %v566 = vpack.c.b16 %v550, %v548
        %v567 = vpack.c.b16 %v553, %v551
        %v568 = vpack.c.b16 %v554, %v552
        %v569 = vpack.c.b16 %v557, %v555
        %v570 = vpack.c.b16 %v558, %v556
        %vm583 = vcmask 785408
        %v585 = vsel %vm583, %v509, 0
        %v588 = vsel %vm583, %v510, 0
        %590 = vmatprep.subr.bf16.mxu0 0
        %591 = vmatpush1.bf16.msra.mxu0 0
        %592 = vmatprep.subr.bf16.mxu0 0
        %593 = vmatpush1.bf16.msra.mxu0 0
        %594 = vmatprep.subr.bf16.mxu0 %v570
        %595 = vmatpush1.bf16.msra.mxu0 %v569
        %596 = vmatprep.subr.bf16.mxu0 %v568
        %597 = vmatpush1.bf16.msra.mxu0 %v567
        %598 = vmatprep.subr.bf16.mxu0 %v566
        %599 = vmatpush1.bf16.msra.mxu0 %v565
        %600 = vmatprep.subr.bf16.mxu0 %v564
        %601 = vmatpush1.bf16.msra.mxu0 %v563
        %602 = vmatprep.subr.bf16.mxu0 %v562
        %603 = vmatpush1.bf16.msra.mxu0 %v561
        %604 = vmatprep.subr.bf16.mxu0 %v560
        %605 = vmatpush1.bf16.msra.mxu0 %v559
        %606 = vmatprep.subr.bf16.mxu0 0
        %607 = vmatpush2.bf16.msra.mxu0 0
        %608 = vmatprep.subr.bf16.mxu0 0
        %609 = vmatpush2.bf16.msra.mxu0 0
        %610 = vmatprep.subr.bf16.mxu0 0
        %611 = vmatpush2.bf16.msra.mxu0 0
        %612 = vmatprep.subr.bf16.mxu0 0
        %613 = vmatpush2.bf16.msra.mxu0 0
        %614 = vmatprep.subr.bf16.mxu0 0
        %615 = vmatpush2.bf16.msra.mxu0 0
        %616 = vmatprep.subr.bf16.mxu0 0
        %617 = vmatpush2.bf16.msra.mxu0 0
        %618 = vmatprep.subr.bf16.mxu0 0
        %619 = vmatpush2.bf16.msra.mxu0 0
        %620 = vmatprep.subr.bf16.mxu0 0
        %621 = vmatpush2.bf16.msra.mxu0 0
        %622 = vmatprep.mubr.bf16.mxu0 0
        %623 = vmatmul.mubr.bf16.gmra.mxu0 %v585
        %v624 = vpop.f32.mrf.mxu0
        %v625 = vadd.f32 0.0, %v624
        %v626 = vpop.f32.mrf.mxu0
        %v627 = vadd.f32 0.0, %v626
        %v628 = vpop.f32.mrf.mxu0
        %v629 = vadd.f32 0.0, %v628
        %v630 = vpop.f32.mrf.mxu0
        %v631 = vadd.f32 0.0, %v630
        %632 = vmatprep.mubr.bf16.mxu0 0
        %633 = vmatmul.mubr.bf16.gmra.mxu0 %v588
        %v634 = vpop.f32.mrf.mxu0
        %v635 = vadd.f32 0.0, %v634
        %v636 = vpop.f32.mrf.mxu0
        %v637 = vadd.f32 0.0, %v636
        %v638 = vpop.f32.mrf.mxu0
        %v639 = vadd.f32 0.0, %v638
        %v640 = vpop.f32.mrf.mxu0
        %v641 = vadd.f32 0.0, %v640
        %642 = vdwg.mxu0
        %v643 = vadd.f32 %v502, %v625
        %v644 = vadd.f32 %v506, %v627
        %v645 = vadd.f32 %v502, %v629
        %v646 = vadd.f32 %v506, %v631
        %v647 = vadd.f32 %v502, %v635
        %v648 = vadd.f32 %v506, %v637
        %v649 = vadd.f32 %v502, %v639
        %v650 = vadd.f32 %v506, %v641
        %s651 = scalar_lea.vmem %s1, 96
        %v652 = vld [vmem:[%s651] sm:$0xff]
        %v653 = vld [vmem:[%s651 + $0x8] sm:$0xff]
        %v654 = vld [vmem:[%s651 + $0x10] sm:$0xff]
        %v655 = vld [vmem:[%s651 + $0x18] sm:$0xff]
        %v656 = vld [vmem:[%s651 + $0x20] sm:$0xff]
        %v657 = vld [vmem:[%s651 + $0x28] sm:$0xff]
        %v658 = vld [vmem:[%s651 + $0x30] sm:$0xff]
        %v659 = vld [vmem:[%s651 + $0x38] sm:$0xff]
        %v660 = vld [vmem:[%s651 + $0x40] sm:$0xff]
        %v661 = vld [vmem:[%s651 + $0x48] sm:$0xff]
        %v662 = vld [vmem:[%s651 + $0x50] sm:$0xff]
        %v663 = vld [vmem:[%s651 + $0x58] sm:$0xff]
        %vm664 = vsmask.f32 7424
        %v665 = vshrl.u32 %v509, 16
        %v667 = vshll.u32 %v509, 16
        %v669 = vrot.slane %v667, 1
        %v670 = vor.u32 %v665, %v669
        %v671 = vshll.u32 %v510, 16
        %v673 = vrot.slane %v671, 1
        %v674 = vsel %vm664, %v670, %v673
        %v675 = vshrl.u32 %v510, 16
        %v677 = vor.u32 %v675, %v673
        %v690 = vunpack.c.l.b16 %v652
        %v691 = vunpack.c.h.b16 %v652
        %v692 = vunpack.c.l.b16 %v653
        %v693 = vunpack.c.h.b16 %v653
        %v694 = vunpack.c.l.b16 %v654
        %v695 = vunpack.c.h.b16 %v654
        %v696 = vunpack.c.l.b16 %v655
        %v697 = vunpack.c.h.b16 %v655
        %v698 = vunpack.c.l.b16 %v656
        %v699 = vunpack.c.h.b16 %v656
        %v700 = vunpack.c.l.b16 %v657
        %v701 = vunpack.c.h.b16 %v657
        %v702 = vunpack.c.l.b16 %v658
        %v703 = vunpack.c.h.b16 %v658
        %v704 = vunpack.c.l.b16 %v659
        %v705 = vunpack.c.h.b16 %v659
        %v706 = vunpack.c.l.b16 %v660
        %v707 = vunpack.c.h.b16 %v660
        %v708 = vunpack.c.l.b16 %v661
        %v709 = vunpack.c.h.b16 %v661
        %v710 = vunpack.c.l.b16 %v662
        %v711 = vunpack.c.h.b16 %v662
        %v712 = vunpack.c.l.b16 %v663
        %v713 = vunpack.c.h.b16 %v663
        %v714 = vpack.c.b16 %v692, %v690
        %v715 = vpack.c.b16 %v693, %v691
        %v716 = vpack.c.b16 %v696, %v694
        %v717 = vpack.c.b16 %v697, %v695
        %v718 = vpack.c.b16 %v700, %v698
        %v719 = vpack.c.b16 %v701, %v699
        %v720 = vpack.c.b16 %v704, %v702
        %v721 = vpack.c.b16 %v705, %v703
        %v722 = vpack.c.b16 %v708, %v706
        %v723 = vpack.c.b16 %v709, %v707
        %v724 = vpack.c.b16 %v712, %v710
        %v725 = vpack.c.b16 %v713, %v711
        %v739 = vsel %vm583, %v674, 0
        %v742 = vsel %vm583, %v677, 0
        %744 = vmatprep.subr.bf16.mxu0 0
        %745 = vmatpush1.bf16.msra.mxu0 0
        %746 = vmatprep.subr.bf16.mxu0 0
        %747 = vmatpush1.bf16.msra.mxu0 0
        %748 = vmatprep.subr.bf16.mxu0 %v725
        %749 = vmatpush1.bf16.msra.mxu0 %v724
        %750 = vmatprep.subr.bf16.mxu0 %v723
        %751 = vmatpush1.bf16.msra.mxu0 %v722
        %752 = vmatprep.subr.bf16.mxu0 %v721
        %753 = vmatpush1.bf16.msra.mxu0 %v720
        %754 = vmatprep.subr.bf16.mxu0 %v719
        %755 = vmatpush1.bf16.msra.mxu0 %v718
        %756 = vmatprep.subr.bf16.mxu0 %v717
        %757 = vmatpush1.bf16.msra.mxu0 %v716
        %758 = vmatprep.subr.bf16.mxu0 %v715
        %759 = vmatpush1.bf16.msra.mxu0 %v714
        %760 = vmatprep.subr.bf16.mxu0 0
        %761 = vmatpush2.bf16.msra.mxu0 0
        %762 = vmatprep.subr.bf16.mxu0 0
        %763 = vmatpush2.bf16.msra.mxu0 0
        %764 = vmatprep.subr.bf16.mxu0 0
        %765 = vmatpush2.bf16.msra.mxu0 0
        %766 = vmatprep.subr.bf16.mxu0 0
        %767 = vmatpush2.bf16.msra.mxu0 0
        %768 = vmatprep.subr.bf16.mxu0 0
        %769 = vmatpush2.bf16.msra.mxu0 0
        %770 = vmatprep.subr.bf16.mxu0 0
        %771 = vmatpush2.bf16.msra.mxu0 0
        %772 = vmatprep.subr.bf16.mxu0 0
        %773 = vmatpush2.bf16.msra.mxu0 0
        %774 = vmatprep.subr.bf16.mxu0 0
        %775 = vmatpush2.bf16.msra.mxu0 0
        %776 = vmatprep.mubr.bf16.mxu0 0
        %777 = vmatmul.mubr.bf16.gmra.mxu0 %v739
        %v778 = vpop.f32.mrf.mxu0
        %v779 = vadd.f32 0.0, %v778
        %v780 = vpop.f32.mrf.mxu0
        %v781 = vadd.f32 0.0, %v780
        %v782 = vpop.f32.mrf.mxu0
        %v783 = vadd.f32 0.0, %v782
        %v784 = vpop.f32.mrf.mxu0
        %v785 = vadd.f32 0.0, %v784
        %786 = vmatprep.mubr.bf16.mxu0 0
        %787 = vmatmul.mubr.bf16.gmra.mxu0 %v742
        %v788 = vpop.f32.mrf.mxu0
        %v789 = vadd.f32 0.0, %v788
        %v790 = vpop.f32.mrf.mxu0
        %v791 = vadd.f32 0.0, %v790
        %v792 = vpop.f32.mrf.mxu0
        %v793 = vadd.f32 0.0, %v792
        %v794 = vpop.f32.mrf.mxu0
        %v795 = vadd.f32 0.0, %v794
        %796 = vdwg.mxu0
        %v797 = vadd.f32 %v643, %v779
        %v798 = vadd.f32 %v644, %v781
        %v799 = vadd.f32 %v645, %v783
        %v800 = vadd.f32 %v646, %v785
        %v801 = vadd.f32 %v647, %v789
        %v802 = vadd.f32 %v648, %v791
        %v803 = vadd.f32 %v649, %v793
        %v804 = vadd.f32 %v650, %v795
        %s805 = scalar_lea.vmem %s1, 192
        %v806 = vld [vmem:[%s805] sm:$0xff]
        %v807 = vld [vmem:[%s805 + $0x8] sm:$0xff]
        %v808 = vld [vmem:[%s805 + $0x10] sm:$0xff]
        %v809 = vld [vmem:[%s805 + $0x18] sm:$0xff]
        %v810 = vld [vmem:[%s805 + $0x20] sm:$0xff]
        %v811 = vld [vmem:[%s805 + $0x28] sm:$0xff]
        %v812 = vld [vmem:[%s805 + $0x30] sm:$0xff]
        %v813 = vld [vmem:[%s805 + $0x38] sm:$0xff]
        %v814 = vld [vmem:[%s805 + $0x40] sm:$0xff]
        %v815 = vld [vmem:[%s805 + $0x48] sm:$0xff]
        %v816 = vld [vmem:[%s805 + $0x50] sm:$0xff]
        %v817 = vld [vmem:[%s805 + $0x58] sm:$0xff]
        %vm820 = vcmask 1046528
        %v821 = vrot.slane %v509, 1
        %v822 = vrot.slane %v510, 1
        %v823 = vsel %vm820, %v821, %v822
        %v836 = vunpack.c.l.b16 %v806
        %v837 = vunpack.c.h.b16 %v806
        %v838 = vunpack.c.l.b16 %v807
        %v839 = vunpack.c.h.b16 %v807
        %v840 = vunpack.c.l.b16 %v808
        %v841 = vunpack.c.h.b16 %v808
        %v842 = vunpack.c.l.b16 %v809
        %v843 = vunpack.c.h.b16 %v809
        %v844 = vunpack.c.l.b16 %v810
        %v845 = vunpack.c.h.b16 %v810
        %v846 = vunpack.c.l.b16 %v811
        %v847 = vunpack.c.h.b16 %v811
        %v848 = vunpack.c.l.b16 %v812
        %v849 = vunpack.c.h.b16 %v812
        %v850 = vunpack.c.l.b16 %v813
        %v851 = vunpack.c.h.b16 %v813
        %v852 = vunpack.c.l.b16 %v814
        %v853 = vunpack.c.h.b16 %v814
        %v854 = vunpack.c.l.b16 %v815
        %v855 = vunpack.c.h.b16 %v815
        %v856 = vunpack.c.l.b16 %v816
        %v857 = vunpack.c.h.b16 %v816
        %v858 = vunpack.c.l.b16 %v817
        %v859 = vunpack.c.h.b16 %v817
        %v860 = vpack.c.b16 %v838, %v836
        %v861 = vpack.c.b16 %v839, %v837
        %v862 = vpack.c.b16 %v842, %v840
        %v863 = vpack.c.b16 %v843, %v841
        %v864 = vpack.c.b16 %v846, %v844
        %v865 = vpack.c.b16 %v847, %v845
        %v866 = vpack.c.b16 %v850, %v848
        %v867 = vpack.c.b16 %v851, %v849
        %v868 = vpack.c.b16 %v854, %v852
        %v869 = vpack.c.b16 %v855, %v853
        %v870 = vpack.c.b16 %v858, %v856
        %v871 = vpack.c.b16 %v859, %v857
        %v885 = vsel %vm583, %v823, 0
        %v888 = vsel %vm583, %v822, 0
        %890 = vmatprep.subr.bf16.mxu0 0
        %891 = vmatpush1.bf16.msra.mxu0 0
        %892 = vmatprep.subr.bf16.mxu0 0
        %893 = vmatpush1.bf16.msra.mxu0 0
        %894 = vmatprep.subr.bf16.mxu0 %v871
        %895 = vmatpush1.bf16.msra.mxu0 %v870
        %896 = vmatprep.subr.bf16.mxu0 %v869
        %897 = vmatpush1.bf16.msra.mxu0 %v868
        %898 = vmatprep.subr.bf16.mxu0 %v867
        %899 = vmatpush1.bf16.msra.mxu0 %v866
        %900 = vmatprep.subr.bf16.mxu0 %v865
        %901 = vmatpush1.bf16.msra.mxu0 %v864
        %902 = vmatprep.subr.bf16.mxu0 %v863
        %903 = vmatpush1.bf16.msra.mxu0 %v862
        %904 = vmatprep.subr.bf16.mxu0 %v861
        %905 = vmatpush1.bf16.msra.mxu0 %v860
        %906 = vmatprep.subr.bf16.mxu0 0
        %907 = vmatpush2.bf16.msra.mxu0 0
        %908 = vmatprep.subr.bf16.mxu0 0
        %909 = vmatpush2.bf16.msra.mxu0 0
        %910 = vmatprep.subr.bf16.mxu0 0
        %911 = vmatpush2.bf16.msra.mxu0 0
        %912 = vmatprep.subr.bf16.mxu0 0
        %913 = vmatpush2.bf16.msra.mxu0 0
        %914 = vmatprep.subr.bf16.mxu0 0
        %915 = vmatpush2.bf16.msra.mxu0 0
        %916 = vmatprep.subr.bf16.mxu0 0
        %917 = vmatpush2.bf16.msra.mxu0 0
        %918 = vmatprep.subr.bf16.mxu0 0
        %919 = vmatpush2.bf16.msra.mxu0 0
        %920 = vmatprep.subr.bf16.mxu0 0
        %921 = vmatpush2.bf16.msra.mxu0 0
        %922 = vmatprep.mubr.bf16.mxu0 0
        %923 = vmatmul.mubr.bf16.gmra.mxu0 %v885
        %v924 = vpop.f32.mrf.mxu0
        %v925 = vadd.f32 0.0, %v924
        %v926 = vpop.f32.mrf.mxu0
        %v927 = vadd.f32 0.0, %v926
        %v928 = vpop.f32.mrf.mxu0
        %v929 = vadd.f32 0.0, %v928
        %v930 = vpop.f32.mrf.mxu0
        %v931 = vadd.f32 0.0, %v930
        %932 = vmatprep.mubr.bf16.mxu0 0
        %933 = vmatmul.mubr.bf16.gmra.mxu0 %v888
        %v934 = vpop.f32.mrf.mxu0
        %v935 = vadd.f32 0.0, %v934
        %v936 = vpop.f32.mrf.mxu0
        %v937 = vadd.f32 0.0, %v936
        %v938 = vpop.f32.mrf.mxu0
        %v939 = vadd.f32 0.0, %v938
        %v940 = vpop.f32.mrf.mxu0
        %v941 = vadd.f32 0.0, %v940
        %942 = vdwg.mxu0
        %v943 = vadd.f32 %v797, %v925
        %v944 = vadd.f32 %v798, %v927
        %v945 = vadd.f32 %v799, %v929
        %v946 = vadd.f32 %v800, %v931
        %v947 = vadd.f32 %v801, %v935
        %v948 = vadd.f32 %v802, %v937
        %v949 = vadd.f32 %v803, %v939
        %v950 = vadd.f32 %v804, %v941
        %s951 = scalar_lea.vmem %s1, 288
        %v952 = vld [vmem:[%s951] sm:$0xff]
        %v953 = vld [vmem:[%s951 + $0x8] sm:$0xff]
        %v954 = vld [vmem:[%s951 + $0x10] sm:$0xff]
        %v955 = vld [vmem:[%s951 + $0x18] sm:$0xff]
        %v956 = vld [vmem:[%s951 + $0x20] sm:$0xff]
        %v957 = vld [vmem:[%s951 + $0x28] sm:$0xff]
        %v958 = vld [vmem:[%s951 + $0x30] sm:$0xff]
        %v959 = vld [vmem:[%s951 + $0x38] sm:$0xff]
        %v960 = vld [vmem:[%s951 + $0x40] sm:$0xff]
        %v961 = vld [vmem:[%s951 + $0x48] sm:$0xff]
        %v962 = vld [vmem:[%s951 + $0x50] sm:$0xff]
        %v963 = vld [vmem:[%s951 + $0x58] sm:$0xff]
        %vm964 = vsmask.f32 6400
        %v965 = vrot.slane %v665, 1
        %v966 = vrot.slane %v667, 2
        %v967 = vor.u32 %v965, %v966
        %v968 = vrot.slane %v675, 1
        %v969 = vrot.slane %v671, 2
        %v970 = vor.u32 %v968, %v969
        %v971 = vsel %vm964, %v967, %v970
        %v984 = vunpack.c.l.b16 %v952
        %v985 = vunpack.c.h.b16 %v952
        %v986 = vunpack.c.l.b16 %v953
        %v987 = vunpack.c.h.b16 %v953
        %v988 = vunpack.c.l.b16 %v954
        %v989 = vunpack.c.h.b16 %v954
        %v990 = vunpack.c.l.b16 %v955
        %v991 = vunpack.c.h.b16 %v955
        %v992 = vunpack.c.l.b16 %v956
        %v993 = vunpack.c.h.b16 %v956
        %v994 = vunpack.c.l.b16 %v957
        %v995 = vunpack.c.h.b16 %v957
        %v996 = vunpack.c.l.b16 %v958
        %v997 = vunpack.c.h.b16 %v958
        %v998 = vunpack.c.l.b16 %v959
        %v999 = vunpack.c.h.b16 %v959
        %v1000 = vunpack.c.l.b16 %v960
        %v1001 = vunpack.c.h.b16 %v960
        %v1002 = vunpack.c.l.b16 %v961
        %v1003 = vunpack.c.h.b16 %v961
        %v1004 = vunpack.c.l.b16 %v962
        %v1005 = vunpack.c.h.b16 %v962
        %v1006 = vunpack.c.l.b16 %v963
        %v1007 = vunpack.c.h.b16 %v963
        %v1008 = vpack.c.b16 %v986, %v984
        %v1009 = vpack.c.b16 %v987, %v985
        %v1010 = vpack.c.b16 %v990, %v988
        %v1011 = vpack.c.b16 %v991, %v989
        %v1012 = vpack.c.b16 %v994, %v992
        %v1013 = vpack.c.b16 %v995, %v993
        %v1014 = vpack.c.b16 %v998, %v996
        %v1015 = vpack.c.b16 %v999, %v997
        %v1016 = vpack.c.b16 %v1002, %v1000
        %v1017 = vpack.c.b16 %v1003, %v1001
        %v1018 = vpack.c.b16 %v1006, %v1004
        %v1019 = vpack.c.b16 %v1007, %v1005
        %v1033 = vsel %vm583, %v971, 0
        %v1036 = vsel %vm583, %v970, 0
        %1038 = vmatprep.subr.bf16.mxu0 0
        %1039 = vmatpush1.bf16.msra.mxu0 0
        %1040 = vmatprep.subr.bf16.mxu0 0
        %1041 = vmatpush1.bf16.msra.mxu0 0
        %1042 = vmatprep.subr.bf16.mxu0 %v1019
        %1043 = vmatpush1.bf16.msra.mxu0 %v1018
        %1044 = vmatprep.subr.bf16.mxu0 %v1017
        %1045 = vmatpush1.bf16.msra.mxu0 %v1016
        %1046 = vmatprep.subr.bf16.mxu0 %v1015
        %1047 = vmatpush1.bf16.msra.mxu0 %v1014
        %1048 = vmatprep.subr.bf16.mxu0 %v1013
        %1049 = vmatpush1.bf16.msra.mxu0 %v1012
        %1050 = vmatprep.subr.bf16.mxu0 %v1011
        %1051 = vmatpush1.bf16.msra.mxu0 %v1010
        %1052 = vmatprep.subr.bf16.mxu0 %v1009
        %1053 = vmatpush1.bf16.msra.mxu0 %v1008
        %1054 = vmatprep.subr.bf16.mxu0 0
        %1055 = vmatpush2.bf16.msra.mxu0 0
        %1056 = vmatprep.subr.bf16.mxu0 0
        %1057 = vmatpush2.bf16.msra.mxu0 0
        %1058 = vmatprep.subr.bf16.mxu0 0
        %1059 = vmatpush2.bf16.msra.mxu0 0
        %1060 = vmatprep.subr.bf16.mxu0 0
        %1061 = vmatpush2.bf16.msra.mxu0 0
        %1062 = vmatprep.subr.bf16.mxu0 0
        %1063 = vmatpush2.bf16.msra.mxu0 0
        %1064 = vmatprep.subr.bf16.mxu0 0
        %1065 = vmatpush2.bf16.msra.mxu0 0
        %1066 = vmatprep.subr.bf16.mxu0 0
        %1067 = vmatpush2.bf16.msra.mxu0 0
        %1068 = vmatprep.subr.bf16.mxu0 0
        %1069 = vmatpush2.bf16.msra.mxu0 0
        %1070 = vmatprep.mubr.bf16.mxu0 0
        %1071 = vmatmul.mubr.bf16.gmra.mxu0 %v1033
        %v1072 = vpop.f32.mrf.mxu0
        %v1073 = vadd.f32 0.0, %v1072
        %v1074 = vpop.f32.mrf.mxu0
        %v1075 = vadd.f32 0.0, %v1074
        %v1076 = vpop.f32.mrf.mxu0
        %v1077 = vadd.f32 0.0, %v1076
        %v1078 = vpop.f32.mrf.mxu0
        %v1079 = vadd.f32 0.0, %v1078
        %1080 = vmatprep.mubr.bf16.mxu0 0
        %1081 = vmatmul.mubr.bf16.gmra.mxu0 %v1036
        %v1082 = vpop.f32.mrf.mxu0
        %v1083 = vadd.f32 0.0, %v1082
        %v1084 = vpop.f32.mrf.mxu0
        %v1085 = vadd.f32 0.0, %v1084
        %v1086 = vpop.f32.mrf.mxu0
        %v1087 = vadd.f32 0.0, %v1086
        %v1088 = vpop.f32.mrf.mxu0
        %v1089 = vadd.f32 0.0, %v1088
        %1090 = vdwg.mxu0
        %v1091 = vadd.f32 %v943, %v1073
        %v1092 = vadd.f32 %v944, %v1075
        %v1093 = vadd.f32 %v945, %v1077
        %v1094 = vadd.f32 %v946, %v1079
        %v1095 = vadd.f32 %v947, %v1083
        %v1096 = vadd.f32 %v948, %v1085
        %v1097 = vadd.f32 %v949, %v1087
        %v1098 = vadd.f32 %v950, %v1089
        %s1099 = scalar_lea.vmem %s1, 384
        %v1100 = vld [vmem:[%s1099] sm:$0xff]
        %v1101 = vld [vmem:[%s1099 + $0x8] sm:$0xff]
        %v1102 = vld [vmem:[%s1099 + $0x10] sm:$0xff]
        %v1103 = vld [vmem:[%s1099 + $0x18] sm:$0xff]
        %v1104 = vld [vmem:[%s1099 + $0x20] sm:$0xff]
        %v1105 = vld [vmem:[%s1099 + $0x28] sm:$0xff]
        %v1106 = vld [vmem:[%s1099 + $0x30] sm:$0xff]
        %v1107 = vld [vmem:[%s1099 + $0x38] sm:$0xff]
        %v1108 = vld [vmem:[%s1099 + $0x40] sm:$0xff]
        %v1109 = vld [vmem:[%s1099 + $0x48] sm:$0xff]
        %v1110 = vld [vmem:[%s1099 + $0x50] sm:$0xff]
        %v1111 = vld [vmem:[%s1099 + $0x58] sm:$0xff]
        %vm1112 = vcmask 1045504
        %v1113 = vrot.slane %v509, 2
        %v1114 = vrot.slane %v510, 2
        %v1115 = vsel %vm1112, %v1113, %v1114
        %v1128 = vunpack.c.l.b16 %v1100
        %v1129 = vunpack.c.h.b16 %v1100
        %v1130 = vunpack.c.l.b16 %v1101
        %v1131 = vunpack.c.h.b16 %v1101
        %v1132 = vunpack.c.l.b16 %v1102
        %v1133 = vunpack.c.h.b16 %v1102
        %v1134 = vunpack.c.l.b16 %v1103
        %v1135 = vunpack.c.h.b16 %v1103
        %v1136 = vunpack.c.l.b16 %v1104
        %v1137 = vunpack.c.h.b16 %v1104
        %v1138 = vunpack.c.l.b16 %v1105
        %v1139 = vunpack.c.h.b16 %v1105
        %v1140 = vunpack.c.l.b16 %v1106
        %v1141 = vunpack.c.h.b16 %v1106
        %v1142 = vunpack.c.l.b16 %v1107
        %v1143 = vunpack.c.h.b16 %v1107
        %v1144 = vunpack.c.l.b16 %v1108
        %v1145 = vunpack.c.h.b16 %v1108
        %v1146 = vunpack.c.l.b16 %v1109
        %v1147 = vunpack.c.h.b16 %v1109
        %v1148 = vunpack.c.l.b16 %v1110
        %v1149 = vunpack.c.h.b16 %v1110
        %v1150 = vunpack.c.l.b16 %v1111
        %v1151 = vunpack.c.h.b16 %v1111
        %v1152 = vpack.c.b16 %v1130, %v1128
        %v1153 = vpack.c.b16 %v1131, %v1129
        %v1154 = vpack.c.b16 %v1134, %v1132
        %v1155 = vpack.c.b16 %v1135, %v1133
        %v1156 = vpack.c.b16 %v1138, %v1136
        %v1157 = vpack.c.b16 %v1139, %v1137
        %v1158 = vpack.c.b16 %v1142, %v1140
        %v1159 = vpack.c.b16 %v1143, %v1141
        %v1160 = vpack.c.b16 %v1146, %v1144
        %v1161 = vpack.c.b16 %v1147, %v1145
        %v1162 = vpack.c.b16 %v1150, %v1148
        %v1163 = vpack.c.b16 %v1151, %v1149
        %v1177 = vsel %vm583, %v1115, 0
        %v1180 = vsel %vm583, %v1114, 0
        %1182 = vmatprep.subr.bf16.mxu0 0
        %1183 = vmatpush1.bf16.msra.mxu0 0
        %1184 = vmatprep.subr.bf16.mxu0 0
        %1185 = vmatpush1.bf16.msra.mxu0 0
        %1186 = vmatprep.subr.bf16.mxu0 %v1163
        %1187 = vmatpush1.bf16.msra.mxu0 %v1162
        %1188 = vmatprep.subr.bf16.mxu0 %v1161
        %1189 = vmatpush1.bf16.msra.mxu0 %v1160
        %1190 = vmatprep.subr.bf16.mxu0 %v1159
        %1191 = vmatpush1.bf16.msra.mxu0 %v1158
        %1192 = vmatprep.subr.bf16.mxu0 %v1157
        %1193 = vmatpush1.bf16.msra.mxu0 %v1156
        %1194 = vmatprep.subr.bf16.mxu0 %v1155
        %1195 = vmatpush1.bf16.msra.mxu0 %v1154
        %1196 = vmatprep.subr.bf16.mxu0 %v1153
        %1197 = vmatpush1.bf16.msra.mxu0 %v1152
        %1198 = vmatprep.subr.bf16.mxu0 0
        %1199 = vmatpush2.bf16.msra.mxu0 0
        %1200 = vmatprep.subr.bf16.mxu0 0
        %1201 = vmatpush2.bf16.msra.mxu0 0
        %1202 = vmatprep.subr.bf16.mxu0 0
        %1203 = vmatpush2.bf16.msra.mxu0 0
        %1204 = vmatprep.subr.bf16.mxu0 0
        %1205 = vmatpush2.bf16.msra.mxu0 0
        %1206 = vmatprep.subr.bf16.mxu0 0
        %1207 = vmatpush2.bf16.msra.mxu0 0
        %1208 = vmatprep.subr.bf16.mxu0 0
        %1209 = vmatpush2.bf16.msra.mxu0 0
        %1210 = vmatprep.subr.bf16.mxu0 0
        %1211 = vmatpush2.bf16.msra.mxu0 0
        %1212 = vmatprep.subr.bf16.mxu0 0
        %1213 = vmatpush2.bf16.msra.mxu0 0
        %1214 = vmatprep.mubr.bf16.mxu0 0
        %1215 = vmatmul.mubr.bf16.gmra.mxu0 %v1177
        %v1216 = vpop.f32.mrf.mxu0
        %v1217 = vadd.f32 0.0, %v1216
        %v1218 = vpop.f32.mrf.mxu0
        %v1219 = vadd.f32 0.0, %v1218
        %v1220 = vpop.f32.mrf.mxu0
        %v1221 = vadd.f32 0.0, %v1220
        %v1222 = vpop.f32.mrf.mxu0
        %v1223 = vadd.f32 0.0, %v1222
        %1224 = vmatprep.mubr.bf16.mxu0 0
        %1225 = vmatmul.mubr.bf16.gmra.mxu0 %v1180
        %v1226 = vpop.f32.mrf.mxu0
        %v1227 = vadd.f32 0.0, %v1226
        %v1228 = vpop.f32.mrf.mxu0
        %v1229 = vadd.f32 0.0, %v1228
        %v1230 = vpop.f32.mrf.mxu0
        %v1231 = vadd.f32 0.0, %v1230
        %v1232 = vpop.f32.mrf.mxu0
        %v1233 = vadd.f32 0.0, %v1232
        %1234 = vdwg.mxu0
        %v1235 = vadd.f32 %v1091, %v1217
        %v1236 = vadd.f32 %v1092, %v1219
        %v1237 = vadd.f32 %v1093, %v1221
        %v1238 = vadd.f32 %v1094, %v1223
        %v1239 = vadd.f32 %v1095, %v1227
        %v1240 = vadd.f32 %v1096, %v1229
        %v1241 = vadd.f32 %v1097, %v1231
        %v1242 = vadd.f32 %v1098, %v1233
        %v1243 = vmax.f32 %v1235, 0.0
        %v1244 = vmax.f32 %v1236, 0.0
        %v1245 = vmax.f32 %v1237, 0.0
        %v1246 = vmax.f32 %v1238, 0.0
        %v1247 = vmax.f32 %v1239, 0.0
        %v1248 = vmax.f32 %v1240, 0.0
        %v1249 = vmax.f32 %v1241, 0.0
        %v1250 = vmax.f32 %v1242, 0.0
        %v1251 = vld [vmem:[%s3] sm:$0xf]
        %v1252 = vld [vmem:[%s3 + $0x4] sm:$0xf]
        %v1253 = vld [vmem:[%s3 + $0x8] sm:$0xf]
        %v1254 = vld [vmem:[%s3 + $0xc] sm:$0xf]
        %v1255 = vpack.c.bf16 %v1245, %v1243
        %v1256 = vpack.c.bf16 %v1246, %v1244
        %v1257 = vpack.c.bf16 %v1249, %v1247
        %v1258 = vpack.c.bf16 %v1250, %v1248
        %v1263 = vunpack.c.l.b16 %v1251
        %v1264 = vunpack.c.l.b16 %v1252
        %v1265 = vunpack.c.l.b16 %v1253
        %v1266 = vunpack.c.l.b16 %v1254
        %v1267 = vpack.c.b16 %v1264, %v1263
        %v1268 = vpack.c.b16 %v1266, %v1265
        %vm1269 = vcmask 228352
        %v1271 = vsel %vm1269, %v1267, 0
        %v1274 = vsel %vm1269, %v1268, 0
        %vm1276 = vcmask 1045504
        %v1278 = vsel %vm1276, %v1257, 0
        %v1281 = vsel %vm1276, %v1258, 0
        %1283 = vmatprep.subr.bf16.mxu0 0
        %1284 = vmatpush1.bf16.msra.mxu0 0
        %1285 = vmatprep.subr.bf16.mxu0 0
        %1286 = vmatpush1.bf16.msra.mxu0 0
        %1287 = vmatprep.subr.bf16.mxu0 0
        %1288 = vmatpush1.bf16.msra.mxu0 0
        %1289 = vmatprep.subr.bf16.mxu0 0
        %1290 = vmatpush1.bf16.msra.mxu0 0
        %1291 = vmatprep.subr.bf16.mxu0 0
        %1292 = vmatpush1.bf16.msra.mxu0 0
        %1293 = vmatprep.subr.bf16.mxu0 0
        %1294 = vmatpush1.bf16.msra.mxu0 0
        %1295 = vmatprep.subr.bf16.mxu0 %v1281
        %1296 = vmatpush1.bf16.msra.mxu0 %v1278
        %1297 = vmatprep.subr.bf16.mxu0 %v1256
        %1298 = vmatpush1.bf16.msra.mxu0 %v1255
        %1299 = vmatprep.subr.bf16.mxu0 0
        %1300 = vmatpush2.bf16.msra.mxu0 0
        %1301 = vmatprep.subr.bf16.mxu0 0
        %1302 = vmatpush2.bf16.msra.mxu0 0
        %1303 = vmatprep.subr.bf16.mxu0 0
        %1304 = vmatpush2.bf16.msra.mxu0 0
        %1305 = vmatprep.subr.bf16.mxu0 0
        %1306 = vmatpush2.bf16.msra.mxu0 0
        %1307 = vmatprep.subr.bf16.mxu0 0
        %1308 = vmatpush2.bf16.msra.mxu0 0
        %1309 = vmatprep.subr.bf16.mxu0 0
        %1310 = vmatpush2.bf16.msra.mxu0 0
        %1311 = vmatprep.subr.bf16.mxu0 0
        %1312 = vmatpush2.bf16.msra.mxu0 0
        %1313 = vmatprep.subr.bf16.mxu0 0
        %1314 = vmatpush2.bf16.msra.mxu0 0
        %1315 = vmatprep.mubr.bf16.mxu0 0
        %1316 = vmatmul.mubr.bf16.gmra.mxu0 %v1271
        %v1317 = vpop.f32.mrf.mxu0
        %v1318 = vadd.f32 0.0, %v1317
        %v1319 = vpop.f32.mrf.mxu0
        %v1320 = vadd.f32 0.0, %v1319
        %v1321 = vpop.f32.mrf.mxu0
        %v1322 = vadd.f32 0.0, %v1321
        %v1323 = vpop.f32.mrf.mxu0
        %v1324 = vadd.f32 0.0, %v1323
        %1325 = vmatprep.mubr.bf16.mxu0 0
        %1326 = vmatmul.mubr.bf16.gmra.mxu0 %v1274
        %v1327 = vpop.f32.mrf.mxu0
        %v1328 = vadd.f32 0.0, %v1327
        %v1329 = vpop.f32.mrf.mxu0
        %v1330 = vadd.f32 0.0, %v1329
        %v1331 = vpop.f32.mrf.mxu0
        %v1332 = vadd.f32 0.0, %v1331
        %v1333 = vpop.f32.mrf.mxu0
        %v1334 = vadd.f32 0.0, %v1333
        %1335 = vdwg.mxu0
        %v1336 = vmax.f32 %v1318, %v1328
        %v1337 = vmax.f32 %v1320, %v1330
        %v1338 = vmax.f32 %v1322, %v1332
        %v1339 = vmax.f32 %v1324, %v1334
        %v1340 = vpack.c.bf16 %v1338, %v1336
        %v1341 = vpack.c.bf16 %v1339, %v1337
        %v1342 = vld [vmem:[%s4] sm:$0xff]
        %v1343 = vld [vmem:[%s4 + $0x8] sm:$0xff]
        %v1344 = vld [vmem:[%s4 + $0x10] sm:$0xff]
        %v1345 = vld [vmem:[%s4 + $0x18] sm:$0xff]
        %v1346 = vld [vmem:[%s4 + $0x20] sm:$0xff]
        %v1347 = vld [vmem:[%s4 + $0x28] sm:$0xff]
        %v1348 = vld [vmem:[%s4 + $0x30] sm:$0xff]
        %v1349 = vld [vmem:[%s4 + $0x38] sm:$0xff]
        %v1350 = vld [vmem:[%s4 + $0x40] sm:$0xff]
        %v1351 = vld [vmem:[%s4 + $0x48] sm:$0xff]
        %v1352 = vld [vmem:[%s4 + $0x50] sm:$0xff]
        %v1353 = vld [vmem:[%s4 + $0x58] sm:$0xff]
        %v1354 = vld [vmem:[%s4 + $0x60] sm:$0xff]
        %v1355 = vld [vmem:[%s4 + $0x68] sm:$0xff]
        %v1356 = vld [vmem:[%s4 + $0x70] sm:$0xff]
        %v1357 = vld [vmem:[%s4 + $0x78] sm:$0xff]
        %v1358 = vld [vmem:[%s4 + $0x80] sm:$0xff]
        %v1359 = vld [vmem:[%s4 + $0x88] sm:$0xff]
        %v1360 = vld [vmem:[%s4 + $0x90] sm:$0xff]
        %v1361 = vld [vmem:[%s4 + $0x98] sm:$0xff]
        %v1362 = vld [vmem:[%s4 + $0xa0] sm:$0xff]
        %v1384 = vunpack.c.l.b16 %v1342
        %v1385 = vunpack.c.h.b16 %v1342
        %v1386 = vunpack.c.l.b16 %v1343
        %v1387 = vunpack.c.h.b16 %v1343
        %v1388 = vunpack.c.l.b16 %v1344
        %v1389 = vunpack.c.h.b16 %v1344
        %v1390 = vunpack.c.l.b16 %v1345
        %v1391 = vunpack.c.h.b16 %v1345
        %v1392 = vunpack.c.l.b16 %v1346
        %v1393 = vunpack.c.h.b16 %v1346
        %v1394 = vunpack.c.l.b16 %v1347
        %v1395 = vunpack.c.h.b16 %v1347
        %v1396 = vunpack.c.l.b16 %v1348
        %v1397 = vunpack.c.h.b16 %v1348
        %v1398 = vunpack.c.l.b16 %v1349
        %v1399 = vunpack.c.h.b16 %v1349
        %v1400 = vunpack.c.l.b16 %v1350
        %v1401 = vunpack.c.h.b16 %v1350
        %v1402 = vunpack.c.l.b16 %v1351
        %v1403 = vunpack.c.h.b16 %v1351
        %v1404 = vunpack.c.l.b16 %v1352
        %v1405 = vunpack.c.h.b16 %v1352
        %v1406 = vunpack.c.l.b16 %v1353
        %v1407 = vunpack.c.h.b16 %v1353
        %v1408 = vunpack.c.l.b16 %v1354
        %v1409 = vunpack.c.h.b16 %v1354
        %v1410 = vunpack.c.l.b16 %v1355
        %v1411 = vunpack.c.h.b16 %v1355
        %v1412 = vunpack.c.l.b16 %v1356
        %v1413 = vunpack.c.h.b16 %v1356
        %v1414 = vunpack.c.l.b16 %v1357
        %v1415 = vunpack.c.h.b16 %v1357
        %v1416 = vunpack.c.l.b16 %v1358
        %v1417 = vunpack.c.h.b16 %v1358
        %v1418 = vunpack.c.l.b16 %v1359
        %v1419 = vunpack.c.h.b16 %v1359
        %v1420 = vunpack.c.l.b16 %v1360
        %v1421 = vunpack.c.h.b16 %v1360
        %v1422 = vunpack.c.l.b16 %v1361
        %v1423 = vunpack.c.h.b16 %v1361
        %v1424 = vunpack.c.l.b16 %v1362
        %v1425 = vunpack.c.h.b16 %v1362
        %v1426 = vpack.c.b16 %v1386, %v1384
        %v1427 = vpack.c.b16 %v1387, %v1385
        %v1428 = vpack.c.b16 %v1390, %v1388
        %v1429 = vpack.c.b16 %v1391, %v1389
        %v1430 = vpack.c.b16 %v1394, %v1392
        %v1431 = vpack.c.b16 %v1395, %v1393
        %v1432 = vpack.c.b16 %v1398, %v1396
        %v1433 = vpack.c.b16 %v1399, %v1397
        %v1434 = vpack.c.b16 %v1402, %v1400
        %v1435 = vpack.c.b16 %v1403, %v1401
        %v1436 = vpack.c.b16 %v1406, %v1404
        %v1437 = vpack.c.b16 %v1407, %v1405
        %v1438 = vpack.c.b16 %v1410, %v1408
        %v1439 = vpack.c.b16 %v1411, %v1409
        %v1440 = vpack.c.b16 %v1414, %v1412
        %v1441 = vpack.c.b16 %v1415, %v1413
        %v1442 = vpack.c.b16 %v1418, %v1416
        %v1443 = vpack.c.b16 %v1419, %v1417
        %v1444 = vpack.c.b16 %v1422, %v1420
        %v1445 = vpack.c.b16 %v1423, %v1421
        %v1446 = vpack.c.b16 %v1424, %v1424
        %v1447 = vpack.c.b16 %v1425, %v1425
        %vm1468 = vcmask 326656
        %v1470 = vsel %vm1468, %v1341, 0
        %vm1472 = vcmask 1043456
        %v1474 = vsel %vm1472, %v1446, 0
        %v1477 = vsel %vm1472, %v1447, 0
        %1479 = vmatprep.subr.bf16.mxu0 %v1441
        %1480 = vmatpush1.bf16.msra.mxu0 %v1440
        %1481 = vmatprep.subr.bf16.mxu0 %v1439
        %1482 = vmatpush1.bf16.msra.mxu0 %v1438
        %1483 = vmatprep.subr.bf16.mxu0 %v1437
        %1484 = vmatpush1.bf16.msra.mxu0 %v1436
        %1485 = vmatprep.subr.bf16.mxu0 %v1435
        %1486 = vmatpush1.bf16.msra.mxu0 %v1434
        %1487 = vmatprep.subr.bf16.mxu0 %v1433
        %1488 = vmatpush1.bf16.msra.mxu0 %v1432
        %1489 = vmatprep.subr.bf16.mxu0 %v1431
        %1490 = vmatpush1.bf16.msra.mxu0 %v1430
        %1491 = vmatprep.subr.bf16.mxu0 %v1429
        %1492 = vmatpush1.bf16.msra.mxu0 %v1428
        %1493 = vmatprep.subr.bf16.mxu0 %v1427
        %1494 = vmatpush1.bf16.msra.mxu0 %v1426
        %1495 = vmatprep.subr.bf16.mxu0 0
        %1496 = vmatpush2.bf16.msra.mxu0 0
        %1497 = vmatprep.subr.bf16.mxu0 0
        %1498 = vmatpush2.bf16.msra.mxu0 0
        %1499 = vmatprep.subr.bf16.mxu0 0
        %1500 = vmatpush2.bf16.msra.mxu0 0
        %1501 = vmatprep.subr.bf16.mxu0 0
        %1502 = vmatpush2.bf16.msra.mxu0 0
        %1503 = vmatprep.subr.bf16.mxu0 0
        %1504 = vmatpush2.bf16.msra.mxu0 0
        %1505 = vmatprep.subr.bf16.mxu0 %v1477
        %1506 = vmatpush2.bf16.msra.mxu0 %v1474
        %1507 = vmatprep.subr.bf16.mxu0 %v1445
        %1508 = vmatpush2.bf16.msra.mxu0 %v1444
        %1509 = vmatprep.subr.bf16.mxu0 %v1443
        %1510 = vmatpush2.bf16.msra.mxu0 %v1442
        %1511 = vmatprep.mubr.bf16.mxu0 %v1470
        %1512 = vmatmul.mubr.bf16.gmra.mxu0 %v1340
        %v1513 = vpop.f32.mrf.mxu0
        %v1514 = vadd.f32 0.0, %v1513
        %v1515 = vpop.f32.mrf.mxu0
        %v1516 = vadd.f32 0.0, %v1515
        %v1517 = vpop.f32.mrf.mxu0
        %v1518 = vadd.f32 0.0, %v1517
        %v1519 = vpop.f32.mrf.mxu0
        %v1520 = vadd.f32 0.0, %v1519
        %1521 = vdwg.mxu0
        %v1522 = vmax.f32 %v1514, %v1516
        %v1523 = vmax.f32 %v1518, %v1520
        %v1524 = vld [vmem:[%s6] sm:$0x3]
        %v1526 = vlaneseq
        %v1527 = vshrl.u32 %v1526, 7
        %v1528 = vsub.s32 0, %v1527
        %v1529 = vrot.slane %v1524, %v1528
        %v1530 = vlaneseq
        %v1531 = vshrl.u32 %v1530, 7
        %v1532 = vsub.s32 1, %v1531
        %v1533 = vrot.slane %v1524, %v1532
        %v1536 = vpack.c.bf16 %v1523, %v1522
        %v1537 = vld [vmem:[%s5] sm:$0xff]
        %v1538 = vld [vmem:[%s5 + $0x8] sm:$0xff]
        %v1539 = vld [vmem:[%s5 + $0x10] sm:$0xff]
        %v1540 = vld [vmem:[%s5 + $0x18] sm:$0xff]
        %v1541 = vld [vmem:[%s5 + $0x20] sm:$0xff]
        %v1542 = vld [vmem:[%s5 + $0x28] sm:$0xff]
        %v1543 = vld [vmem:[%s5 + $0x30] sm:$0xff]
        %v1544 = vld [vmem:[%s5 + $0x38] sm:$0xff]
        %v1545 = vld [vmem:[%s5 + $0x40] sm:$0xff]
        %v1546 = vld [vmem:[%s5 + $0x48] sm:$0xff]
        %v1547 = vld [vmem:[%s5 + $0x50] sm:$0x33]
        %v1559 = vunpack.c.l.b16 %v1537
        %v1560 = vunpack.c.h.b16 %v1537
        %v1561 = vunpack.c.l.b16 %v1538
        %v1562 = vunpack.c.h.b16 %v1538
        %v1563 = vunpack.c.l.b16 %v1539
        %v1564 = vunpack.c.h.b16 %v1539
        %v1565 = vunpack.c.l.b16 %v1540
        %v1566 = vunpack.c.h.b16 %v1540
        %v1567 = vunpack.c.l.b16 %v1541
        %v1568 = vunpack.c.h.b16 %v1541
        %v1569 = vunpack.c.l.b16 %v1542
        %v1570 = vunpack.c.h.b16 %v1542
        %v1571 = vunpack.c.l.b16 %v1543
        %v1572 = vunpack.c.h.b16 %v1543
        %v1573 = vunpack.c.l.b16 %v1544
        %v1574 = vunpack.c.h.b16 %v1544
        %v1575 = vunpack.c.l.b16 %v1545
        %v1576 = vunpack.c.h.b16 %v1545
        %v1577 = vunpack.c.l.b16 %v1546
        %v1578 = vunpack.c.h.b16 %v1546
        %v1579 = vunpack.c.l.b16 %v1547
        %v1580 = vunpack.c.h.b16 %v1547
        %v1581 = vpack.c.b16 %v1561, %v1559
        %v1582 = vpack.c.b16 %v1562, %v1560
        %v1583 = vpack.c.b16 %v1565, %v1563
        %v1584 = vpack.c.b16 %v1566, %v1564
        %v1585 = vpack.c.b16 %v1569, %v1567
        %v1586 = vpack.c.b16 %v1570, %v1568
        %v1587 = vpack.c.b16 %v1573, %v1571
        %v1588 = vpack.c.b16 %v1574, %v1572
        %v1589 = vpack.c.b16 %v1577, %v1575
        %v1590 = vpack.c.b16 %v1578, %v1576
        %v1591 = vpack.c.b16 %v1579, %v1579
        %v1592 = vpack.c.b16 %v1580, %v1580
        %vm1603 = vcmask 687104
        %v1605 = vsel %vm1603, %v1536, 0
        %vm1607 = vcmask 1041408
        %v1609 = vsel %vm1607, %v1591, 0
        %v1612 = vsel %vm1607, %v1592, 0
        %1614 = vmatprep.subr.bf16.mxu0 0
        %1615 = vmatpush1.bf16.msra.mxu0 0
        %1616 = vmatprep.subr.bf16.mxu0 0
        %1617 = vmatpush1.bf16.msra.mxu0 0
        %1618 = vmatprep.subr.bf16.mxu0 %v1612
        %1619 = vmatpush1.bf16.msra.mxu0 %v1609
        %1620 = vmatprep.subr.bf16.mxu0 %v1590
        %1621 = vmatpush1.bf16.msra.mxu0 %v1589
        %1622 = vmatprep.subr.bf16.mxu0 %v1588
        %1623 = vmatpush1.bf16.msra.mxu0 %v1587
        %1624 = vmatprep.subr.bf16.mxu0 %v1586
        %1625 = vmatpush1.bf16.msra.mxu0 %v1585
        %1626 = vmatprep.subr.bf16.mxu0 %v1584
        %1627 = vmatpush1.bf16.msra.mxu0 %v1583
        %1628 = vmatprep.subr.bf16.mxu0 %v1582
        %1629 = vmatpush1.bf16.msra.mxu0 %v1581
        %1630 = vmatprep.subr.bf16.mxu0 0
        %1631 = vmatpush2.bf16.msra.mxu0 0
        %1632 = vmatprep.subr.bf16.mxu0 0
        %1633 = vmatpush2.bf16.msra.mxu0 0
        %1634 = vmatprep.subr.bf16.mxu0 0
        %1635 = vmatpush2.bf16.msra.mxu0 0
        %1636 = vmatprep.subr.bf16.mxu0 0
        %1637 = vmatpush2.bf16.msra.mxu0 0
        %1638 = vmatprep.subr.bf16.mxu0 0
        %1639 = vmatpush2.bf16.msra.mxu0 0
        %1640 = vmatprep.subr.bf16.mxu0 0
        %1641 = vmatpush2.bf16.msra.mxu0 0
        %1642 = vmatprep.subr.bf16.mxu0 0
        %1643 = vmatpush2.bf16.msra.mxu0 0
        %1644 = vmatprep.subr.bf16.mxu0 0
        %1645 = vmatpush2.bf16.msra.mxu0 0
        %1646 = vmatprep.mubr.bf16.mxu0 0
        %1647 = vmatmul.mubr.bf16.gmra.mxu0 %v1605
        %v1648 = vpop.f32.mrf.mxu0
        %v1649 = vadd.f32 0.0, %v1648
        %v1650 = vpop.f32.mrf.mxu0
        %v1651 = vadd.f32 0.0, %v1650
        %v1652 = vpop.f32.mrf.mxu0
        %v1653 = vadd.f32 0.0, %v1652
        %v1654 = vpop.f32.mrf.mxu0
        %v1655 = vadd.f32 0.0, %v1654
        %1656 = vdwg.mxu0
        %v1657 = vadd.f32 %v1529, %v1649
        %v1658 = vadd.f32 %v1533, %v1651
        %v1659 = vadd.f32 %v1529, %v1653
        %v1660 = vadd.f32 %v1533, %v1655
        %s1661 = scalar_lea.vmem %s5, 88
        %v1662 = vld [vmem:[%s1661] sm:$0xff]
        %v1663 = vld [vmem:[%s1661 + $0x8] sm:$0xff]
        %v1664 = vld [vmem:[%s1661 + $0x10] sm:$0xff]
        %v1665 = vld [vmem:[%s1661 + $0x18] sm:$0xff]
        %v1666 = vld [vmem:[%s1661 + $0x20] sm:$0xff]
        %v1667 = vld [vmem:[%s1661 + $0x28] sm:$0xff]
        %v1668 = vld [vmem:[%s1661 + $0x30] sm:$0xff]
        %v1669 = vld [vmem:[%s1661 + $0x38] sm:$0xff]
        %v1670 = vld [vmem:[%s1661 + $0x40] sm:$0xff]
        %v1671 = vld [vmem:[%s1661 + $0x48] sm:$0xff]
        %v1672 = vld [vmem:[%s1661 + $0x50] sm:$0x33]
        %v1673 = vshrl.u32 %v1536, 16
        %v1675 = vshll.u32 %v1536, 16
        %v1677 = vrot.slane %v1675, 1
        %v1678 = vor.u32 %v1673, %v1677
        %v1690 = vunpack.c.l.b16 %v1662
        %v1691 = vunpack.c.h.b16 %v1662
        %v1692 = vunpack.c.l.b16 %v1663
        %v1693 = vunpack.c.h.b16 %v1663
        %v1694 = vunpack.c.l.b16 %v1664
        %v1695 = vunpack.c.h.b16 %v1664
        %v1696 = vunpack.c.l.b16 %v1665
        %v1697 = vunpack.c.h.b16 %v1665
        %v1698 = vunpack.c.l.b16 %v1666
        %v1699 = vunpack.c.h.b16 %v1666
        %v1700 = vunpack.c.l.b16 %v1667
        %v1701 = vunpack.c.h.b16 %v1667
        %v1702 = vunpack.c.l.b16 %v1668
        %v1703 = vunpack.c.h.b16 %v1668
        %v1704 = vunpack.c.l.b16 %v1669
        %v1705 = vunpack.c.h.b16 %v1669
        %v1706 = vunpack.c.l.b16 %v1670
        %v1707 = vunpack.c.h.b16 %v1670
        %v1708 = vunpack.c.l.b16 %v1671
        %v1709 = vunpack.c.h.b16 %v1671
        %v1710 = vunpack.c.l.b16 %v1672
        %v1711 = vunpack.c.h.b16 %v1672
        %v1712 = vpack.c.b16 %v1692, %v1690
        %v1713 = vpack.c.b16 %v1693, %v1691
        %v1714 = vpack.c.b16 %v1696, %v1694
        %v1715 = vpack.c.b16 %v1697, %v1695
        %v1716 = vpack.c.b16 %v1700, %v1698
        %v1717 = vpack.c.b16 %v1701, %v1699
        %v1718 = vpack.c.b16 %v1704, %v1702
        %v1719 = vpack.c.b16 %v1705, %v1703
        %v1720 = vpack.c.b16 %v1708, %v1706
        %v1721 = vpack.c.b16 %v1709, %v1707
        %v1722 = vpack.c.b16 %v1710, %v1710
        %v1723 = vpack.c.b16 %v1711, %v1711
        %v1735 = vsel %vm1603, %v1678, 0
        %v1738 = vsel %vm1607, %v1722, 0
        %v1741 = vsel %vm1607, %v1723, 0
        %1743 = vmatprep.subr.bf16.mxu0 0
        %1744 = vmatpush1.bf16.msra.mxu0 0
        %1745 = vmatprep.subr.bf16.mxu0 0
        %1746 = vmatpush1.bf16.msra.mxu0 0
        %1747 = vmatprep.subr.bf16.mxu0 %v1741
        %1748 = vmatpush1.bf16.msra.mxu0 %v1738
        %1749 = vmatprep.subr.bf16.mxu0 %v1721
        %1750 = vmatpush1.bf16.msra.mxu0 %v1720
        %1751 = vmatprep.subr.bf16.mxu0 %v1719
        %1752 = vmatpush1.bf16.msra.mxu0 %v1718
        %1753 = vmatprep.subr.bf16.mxu0 %v1717
        %1754 = vmatpush1.bf16.msra.mxu0 %v1716
        %1755 = vmatprep.subr.bf16.mxu0 %v1715
        %1756 = vmatpush1.bf16.msra.mxu0 %v1714
        %1757 = vmatprep.subr.bf16.mxu0 %v1713
        %1758 = vmatpush1.bf16.msra.mxu0 %v1712
        %1759 = vmatprep.subr.bf16.mxu0 0
        %1760 = vmatpush2.bf16.msra.mxu0 0
        %1761 = vmatprep.subr.bf16.mxu0 0
        %1762 = vmatpush2.bf16.msra.mxu0 0
        %1763 = vmatprep.subr.bf16.mxu0 0
        %1764 = vmatpush2.bf16.msra.mxu0 0
        %1765 = vmatprep.subr.bf16.mxu0 0
        %1766 = vmatpush2.bf16.msra.mxu0 0
        %1767 = vmatprep.subr.bf16.mxu0 0
        %1768 = vmatpush2.bf16.msra.mxu0 0
        %1769 = vmatprep.subr.bf16.mxu0 0
        %1770 = vmatpush2.bf16.msra.mxu0 0
        %1771 = vmatprep.subr.bf16.mxu0 0
        %1772 = vmatpush2.bf16.msra.mxu0 0
        %1773 = vmatprep.subr.bf16.mxu0 0
        %1774 = vmatpush2.bf16.msra.mxu0 0
        %1775 = vmatprep.mubr.bf16.mxu0 0
        %1776 = vmatmul.mubr.bf16.gmra.mxu0 %v1735
        %v1777 = vpop.f32.mrf.mxu0
        %v1778 = vadd.f32 0.0, %v1777
        %v1779 = vpop.f32.mrf.mxu0
        %v1780 = vadd.f32 0.0, %v1779
        %v1781 = vpop.f32.mrf.mxu0
        %v1782 = vadd.f32 0.0, %v1781
        %v1783 = vpop.f32.mrf.mxu0
        %v1784 = vadd.f32 0.0, %v1783
        %1785 = vdwg.mxu0
        %v1786 = vadd.f32 %v1657, %v1778
        %v1787 = vadd.f32 %v1658, %v1780
        %v1788 = vadd.f32 %v1659, %v1782
        %v1789 = vadd.f32 %v1660, %v1784
        %s1790 = scalar_lea.vmem %s5, 176
        %v1791 = vld [vmem:[%s1790] sm:$0xff]
        %v1792 = vld [vmem:[%s1790 + $0x8] sm:$0xff]
        %v1793 = vld [vmem:[%s1790 + $0x10] sm:$0xff]
        %v1794 = vld [vmem:[%s1790 + $0x18] sm:$0xff]
        %v1795 = vld [vmem:[%s1790 + $0x20] sm:$0xff]
        %v1796 = vld [vmem:[%s1790 + $0x28] sm:$0xff]
        %v1797 = vld [vmem:[%s1790 + $0x30] sm:$0xff]
        %v1798 = vld [vmem:[%s1790 + $0x38] sm:$0xff]
        %v1799 = vld [vmem:[%s1790 + $0x40] sm:$0xff]
        %v1800 = vld [vmem:[%s1790 + $0x48] sm:$0xff]
        %v1801 = vld [vmem:[%s1790 + $0x50] sm:$0x33]
        %v1803 = vrot.slane %v1536, 1
        %v1815 = vunpack.c.l.b16 %v1791
        %v1816 = vunpack.c.h.b16 %v1791
        %v1817 = vunpack.c.l.b16 %v1792
        %v1818 = vunpack.c.h.b16 %v1792
        %v1819 = vunpack.c.l.b16 %v1793
        %v1820 = vunpack.c.h.b16 %v1793
        %v1821 = vunpack.c.l.b16 %v1794
        %v1822 = vunpack.c.h.b16 %v1794
        %v1823 = vunpack.c.l.b16 %v1795
        %v1824 = vunpack.c.h.b16 %v1795
        %v1825 = vunpack.c.l.b16 %v1796
        %v1826 = vunpack.c.h.b16 %v1796
        %v1827 = vunpack.c.l.b16 %v1797
        %v1828 = vunpack.c.h.b16 %v1797
        %v1829 = vunpack.c.l.b16 %v1798
        %v1830 = vunpack.c.h.b16 %v1798
        %v1831 = vunpack.c.l.b16 %v1799
        %v1832 = vunpack.c.h.b16 %v1799
        %v1833 = vunpack.c.l.b16 %v1800
        %v1834 = vunpack.c.h.b16 %v1800
        %v1835 = vunpack.c.l.b16 %v1801
        %v1836 = vunpack.c.h.b16 %v1801
        %v1837 = vpack.c.b16 %v1817, %v1815
        %v1838 = vpack.c.b16 %v1818, %v1816
        %v1839 = vpack.c.b16 %v1821, %v1819
        %v1840 = vpack.c.b16 %v1822, %v1820
        %v1841 = vpack.c.b16 %v1825, %v1823
        %v1842 = vpack.c.b16 %v1826, %v1824
        %v1843 = vpack.c.b16 %v1829, %v1827
        %v1844 = vpack.c.b16 %v1830, %v1828
        %v1845 = vpack.c.b16 %v1833, %v1831
        %v1846 = vpack.c.b16 %v1834, %v1832
        %v1847 = vpack.c.b16 %v1835, %v1835
        %v1848 = vpack.c.b16 %v1836, %v1836
        %v1860 = vsel %vm1603, %v1803, 0
        %v1863 = vsel %vm1607, %v1847, 0
        %v1866 = vsel %vm1607, %v1848, 0
        %1868 = vmatprep.subr.bf16.mxu0 0
        %1869 = vmatpush1.bf16.msra.mxu0 0
        %1870 = vmatprep.subr.bf16.mxu0 0
        %1871 = vmatpush1.bf16.msra.mxu0 0
        %1872 = vmatprep.subr.bf16.mxu0 %v1866
        %1873 = vmatpush1.bf16.msra.mxu0 %v1863
        %1874 = vmatprep.subr.bf16.mxu0 %v1846
        %1875 = vmatpush1.bf16.msra.mxu0 %v1845
        %1876 = vmatprep.subr.bf16.mxu0 %v1844
        %1877 = vmatpush1.bf16.msra.mxu0 %v1843
        %1878 = vmatprep.subr.bf16.mxu0 %v1842
        %1879 = vmatpush1.bf16.msra.mxu0 %v1841
        %1880 = vmatprep.subr.bf16.mxu0 %v1840
        %1881 = vmatpush1.bf16.msra.mxu0 %v1839
        %1882 = vmatprep.subr.bf16.mxu0 %v1838
        %1883 = vmatpush1.bf16.msra.mxu0 %v1837
        %1884 = vmatprep.subr.bf16.mxu0 0
        %1885 = vmatpush2.bf16.msra.mxu0 0
        %1886 = vmatprep.subr.bf16.mxu0 0
        %1887 = vmatpush2.bf16.msra.mxu0 0
        %1888 = vmatprep.subr.bf16.mxu0 0
        %1889 = vmatpush2.bf16.msra.mxu0 0
        %1890 = vmatprep.subr.bf16.mxu0 0
        %1891 = vmatpush2.bf16.msra.mxu0 0
        %1892 = vmatprep.subr.bf16.mxu0 0
        %1893 = vmatpush2.bf16.msra.mxu0 0
        %1894 = vmatprep.subr.bf16.mxu0 0
        %1895 = vmatpush2.bf16.msra.mxu0 0
        %1896 = vmatprep.subr.bf16.mxu0 0
        %1897 = vmatpush2.bf16.msra.mxu0 0
        %1898 = vmatprep.subr.bf16.mxu0 0
        %1899 = vmatpush2.bf16.msra.mxu0 0
        %1900 = vmatprep.mubr.bf16.mxu0 0
        %1901 = vmatmul.mubr.bf16.gmra.mxu0 %v1860
        %v1902 = vpop.f32.mrf.mxu0
        %v1903 = vadd.f32 0.0, %v1902
        %v1904 = vpop.f32.mrf.mxu0
        %v1905 = vadd.f32 0.0, %v1904
        %v1906 = vpop.f32.mrf.mxu0
        %v1907 = vadd.f32 0.0, %v1906
        %v1908 = vpop.f32.mrf.mxu0
        %v1909 = vadd.f32 0.0, %v1908
        %1910 = vdwg.mxu0
        %v1911 = vadd.f32 %v1786, %v1903
        %v1912 = vadd.f32 %v1787, %v1905
        %v1913 = vadd.f32 %v1788, %v1907
        %v1914 = vadd.f32 %v1789, %v1909
        %s1915 = scalar_lea.vmem %s5, 264
        %v1916 = vld [vmem:[%s1915] sm:$0xff]
        %v1917 = vld [vmem:[%s1915 + $0x8] sm:$0xff]
        %v1918 = vld [vmem:[%s1915 + $0x10] sm:$0xff]
        %v1919 = vld [vmem:[%s1915 + $0x18] sm:$0xff]
        %v1920 = vld [vmem:[%s1915 + $0x20] sm:$0xff]
        %v1921 = vld [vmem:[%s1915 + $0x28] sm:$0xff]
        %v1922 = vld [vmem:[%s1915 + $0x30] sm:$0xff]
        %v1923 = vld [vmem:[%s1915 + $0x38] sm:$0xff]
        %v1924 = vld [vmem:[%s1915 + $0x40] sm:$0xff]
        %v1925 = vld [vmem:[%s1915 + $0x48] sm:$0xff]
        %v1926 = vld [vmem:[%s1915 + $0x50] sm:$0x33]
        %v1927 = vrot.slane %v1673, 1
        %v1928 = vrot.slane %v1675, 2
        %v1929 = vor.u32 %v1927, %v1928
        %v1941 = vunpack.c.l.b16 %v1916
        %v1942 = vunpack.c.h.b16 %v1916
        %v1943 = vunpack.c.l.b16 %v1917
        %v1944 = vunpack.c.h.b16 %v1917
        %v1945 = vunpack.c.l.b16 %v1918
        %v1946 = vunpack.c.h.b16 %v1918
        %v1947 = vunpack.c.l.b16 %v1919
        %v1948 = vunpack.c.h.b16 %v1919
        %v1949 = vunpack.c.l.b16 %v1920
        %v1950 = vunpack.c.h.b16 %v1920
        %v1951 = vunpack.c.l.b16 %v1921
        %v1952 = vunpack.c.h.b16 %v1921
        %v1953 = vunpack.c.l.b16 %v1922
        %v1954 = vunpack.c.h.b16 %v1922
        %v1955 = vunpack.c.l.b16 %v1923
        %v1956 = vunpack.c.h.b16 %v1923
        %v1957 = vunpack.c.l.b16 %v1924
        %v1958 = vunpack.c.h.b16 %v1924
        %v1959 = vunpack.c.l.b16 %v1925
        %v1960 = vunpack.c.h.b16 %v1925
        %v1961 = vunpack.c.l.b16 %v1926
        %v1962 = vunpack.c.h.b16 %v1926
        %v1963 = vpack.c.b16 %v1943, %v1941
        %v1964 = vpack.c.b16 %v1944, %v1942
        %v1965 = vpack.c.b16 %v1947, %v1945
        %v1966 = vpack.c.b16 %v1948, %v1946
        %v1967 = vpack.c.b16 %v1951, %v1949
        %v1968 = vpack.c.b16 %v1952, %v1950
        %v1969 = vpack.c.b16 %v1955, %v1953
        %v1970 = vpack.c.b16 %v1956, %v1954
        %v1971 = vpack.c.b16 %v1959, %v1957
        %v1972 = vpack.c.b16 %v1960, %v1958
        %v1973 = vpack.c.b16 %v1961, %v1961
        %v1974 = vpack.c.b16 %v1962, %v1962
        %v1986 = vsel %vm1603, %v1929, 0
        %v1989 = vsel %vm1607, %v1973, 0
        %v1992 = vsel %vm1607, %v1974, 0
        %1994 = vmatprep.subr.bf16.mxu0 0
        %1995 = vmatpush1.bf16.msra.mxu0 0
        %1996 = vmatprep.subr.bf16.mxu0 0
        %1997 = vmatpush1.bf16.msra.mxu0 0
        %1998 = vmatprep.subr.bf16.mxu0 %v1992
        %1999 = vmatpush1.bf16.msra.mxu0 %v1989
        %2000 = vmatprep.subr.bf16.mxu0 %v1972
        %2001 = vmatpush1.bf16.msra.mxu0 %v1971
        %2002 = vmatprep.subr.bf16.mxu0 %v1970
        %2003 = vmatpush1.bf16.msra.mxu0 %v1969
        %2004 = vmatprep.subr.bf16.mxu0 %v1968
        %2005 = vmatpush1.bf16.msra.mxu0 %v1967
        %2006 = vmatprep.subr.bf16.mxu0 %v1966
        %2007 = vmatpush1.bf16.msra.mxu0 %v1965
        %2008 = vmatprep.subr.bf16.mxu0 %v1964
        %2009 = vmatpush1.bf16.msra.mxu0 %v1963
        %2010 = vmatprep.subr.bf16.mxu0 0
        %2011 = vmatpush2.bf16.msra.mxu0 0
        %2012 = vmatprep.subr.bf16.mxu0 0
        %2013 = vmatpush2.bf16.msra.mxu0 0
        %2014 = vmatprep.subr.bf16.mxu0 0
        %2015 = vmatpush2.bf16.msra.mxu0 0
        %2016 = vmatprep.subr.bf16.mxu0 0
        %2017 = vmatpush2.bf16.msra.mxu0 0
        %2018 = vmatprep.subr.bf16.mxu0 0
        %2019 = vmatpush2.bf16.msra.mxu0 0
        %2020 = vmatprep.subr.bf16.mxu0 0
        %2021 = vmatpush2.bf16.msra.mxu0 0
        %2022 = vmatprep.subr.bf16.mxu0 0
        %2023 = vmatpush2.bf16.msra.mxu0 0
        %2024 = vmatprep.subr.bf16.mxu0 0
        %2025 = vmatpush2.bf16.msra.mxu0 0
        %2026 = vmatprep.mubr.bf16.mxu0 0
        %2027 = vmatmul.mubr.bf16.gmra.mxu0 %v1986
        %v2028 = vpop.f32.mrf.mxu0
        %v2029 = vadd.f32 0.0, %v2028
        %v2030 = vpop.f32.mrf.mxu0
        %v2031 = vadd.f32 0.0, %v2030
        %v2032 = vpop.f32.mrf.mxu0
        %v2033 = vadd.f32 0.0, %v2032
        %v2034 = vpop.f32.mrf.mxu0
        %v2035 = vadd.f32 0.0, %v2034
        %2036 = vdwg.mxu0
        %v2037 = vadd.f32 %v1911, %v2029
        %v2038 = vadd.f32 %v1912, %v2031
        %v2039 = vadd.f32 %v1913, %v2033
        %v2040 = vadd.f32 %v1914, %v2035
        %s2041 = scalar_lea.vmem %s5, 352
        %v2042 = vld [vmem:[%s2041] sm:$0xff]
        %v2043 = vld [vmem:[%s2041 + $0x8] sm:$0xff]
        %v2044 = vld [vmem:[%s2041 + $0x10] sm:$0xff]
        %v2045 = vld [vmem:[%s2041 + $0x18] sm:$0xff]
        %v2046 = vld [vmem:[%s2041 + $0x20] sm:$0xff]
        %v2047 = vld [vmem:[%s2041 + $0x28] sm:$0xff]
        %v2048 = vld [vmem:[%s2041 + $0x30] sm:$0xff]
        %v2049 = vld [vmem:[%s2041 + $0x38] sm:$0xff]
        %v2050 = vld [vmem:[%s2041 + $0x40] sm:$0xff]
        %v2051 = vld [vmem:[%s2041 + $0x48] sm:$0xff]
        %v2052 = vld [vmem:[%s2041 + $0x50] sm:$0x33]
        %v2053 = vrot.slane %v1536, 2
        %v2065 = vunpack.c.l.b16 %v2042
        %v2066 = vunpack.c.h.b16 %v2042
        %v2067 = vunpack.c.l.b16 %v2043
        %v2068 = vunpack.c.h.b16 %v2043
        %v2069 = vunpack.c.l.b16 %v2044
        %v2070 = vunpack.c.h.b16 %v2044
        %v2071 = vunpack.c.l.b16 %v2045
        %v2072 = vunpack.c.h.b16 %v2045
        %v2073 = vunpack.c.l.b16 %v2046
        %v2074 = vunpack.c.h.b16 %v2046
        %v2075 = vunpack.c.l.b16 %v2047
        %v2076 = vunpack.c.h.b16 %v2047
        %v2077 = vunpack.c.l.b16 %v2048
        %v2078 = vunpack.c.h.b16 %v2048
        %v2079 = vunpack.c.l.b16 %v2049
        %v2080 = vunpack.c.h.b16 %v2049
        %v2081 = vunpack.c.l.b16 %v2050
        %v2082 = vunpack.c.h.b16 %v2050
        %v2083 = vunpack.c.l.b16 %v2051
        %v2084 = vunpack.c.h.b16 %v2051
        %v2085 = vunpack.c.l.b16 %v2052
        %v2086 = vunpack.c.h.b16 %v2052
        %v2087 = vpack.c.b16 %v2067, %v2065
        %v2088 = vpack.c.b16 %v2068, %v2066
        %v2089 = vpack.c.b16 %v2071, %v2069
        %v2090 = vpack.c.b16 %v2072, %v2070
        %v2091 = vpack.c.b16 %v2075, %v2073
        %v2092 = vpack.c.b16 %v2076, %v2074
        %v2093 = vpack.c.b16 %v2079, %v2077
        %v2094 = vpack.c.b16 %v2080, %v2078
        %v2095 = vpack.c.b16 %v2083, %v2081
        %v2096 = vpack.c.b16 %v2084, %v2082
        %v2097 = vpack.c.b16 %v2085, %v2085
        %v2098 = vpack.c.b16 %v2086, %v2086
        %v2110 = vsel %vm1603, %v2053, 0
        %v2113 = vsel %vm1607, %v2097, 0
        %v2116 = vsel %vm1607, %v2098, 0
        %2118 = vmatprep.subr.bf16.mxu0 0
        %2119 = vmatpush1.bf16.msra.mxu0 0
        %2120 = vmatprep.subr.bf16.mxu0 0
        %2121 = vmatpush1.bf16.msra.mxu0 0
        %2122 = vmatprep.subr.bf16.mxu0 %v2116
        %2123 = vmatpush1.bf16.msra.mxu0 %v2113
        %2124 = vmatprep.subr.bf16.mxu0 %v2096
        %2125 = vmatpush1.bf16.msra.mxu0 %v2095
        %2126 = vmatprep.subr.bf16.mxu0 %v2094
        %2127 = vmatpush1.bf16.msra.mxu0 %v2093
        %2128 = vmatprep.subr.bf16.mxu0 %v2092
        %2129 = vmatpush1.bf16.msra.mxu0 %v2091
        %2130 = vmatprep.subr.bf16.mxu0 %v2090
        %2131 = vmatpush1.bf16.msra.mxu0 %v2089
        %2132 = vmatprep.subr.bf16.mxu0 %v2088
        %2133 = vmatpush1.bf16.msra.mxu0 %v2087
        %2134 = vmatprep.subr.bf16.mxu0 0
        %2135 = vmatpush2.bf16.msra.mxu0 0
        %2136 = vmatprep.subr.bf16.mxu0 0
        %2137 = vmatpush2.bf16.msra.mxu0 0
        %2138 = vmatprep.subr.bf16.mxu0 0
        %2139 = vmatpush2.bf16.msra.mxu0 0
        %2140 = vmatprep.subr.bf16.mxu0 0
        %2141 = vmatpush2.bf16.msra.mxu0 0
        %2142 = vmatprep.subr.bf16.mxu0 0
        %2143 = vmatpush2.bf16.msra.mxu0 0
        %2144 = vmatprep.subr.bf16.mxu0 0
        %2145 = vmatpush2.bf16.msra.mxu0 0
        %2146 = vmatprep.subr.bf16.mxu0 0
        %2147 = vmatpush2.bf16.msra.mxu0 0
        %2148 = vmatprep.subr.bf16.mxu0 0
        %2149 = vmatpush2.bf16.msra.mxu0 0
        %2150 = vmatprep.mubr.bf16.mxu0 0
        %2151 = vmatmul.mubr.bf16.gmra.mxu0 %v2110
        %v2152 = vpop.f32.mrf.mxu0
        %v2153 = vadd.f32 0.0, %v2152
        %v2154 = vpop.f32.mrf.mxu0
        %v2155 = vadd.f32 0.0, %v2154
        %v2156 = vpop.f32.mrf.mxu0
        %v2157 = vadd.f32 0.0, %v2156
        %v2158 = vpop.f32.mrf.mxu0
        %v2159 = vadd.f32 0.0, %v2158
        %2160 = vdwg.mxu0
        %v2161 = vadd.f32 %v2037, %v2153
        %v2162 = vadd.f32 %v2038, %v2155
        %v2163 = vadd.f32 %v2039, %v2157
        %v2164 = vadd.f32 %v2040, %v2159
        %v2165 = vmax.f32 %v2161, 0.0
        %v2166 = vmax.f32 %v2162, 0.0
        %v2167 = vmax.f32 %v2163, 0.0
        %v2168 = vmax.f32 %v2164, 0.0
        %v2169 = vld [vmem:[%s7] sm:$0xf]
        %v2170 = vld [vmem:[%s7 + $0x4] sm:$0xf]
        %v2171 = vpack.c.bf16 %v2167, %v2165
        %v2172 = vpack.c.bf16 %v2168, %v2166
        %v2175 = vunpack.c.l.b16 %v2169
        %v2176 = vunpack.c.l.b16 %v2170
        %v2177 = vpack.c.b16 %v2176, %v2175
        %vm2178 = vcmask 80896
        %v2180 = vsel %vm2178, %v2177, 0
        %vm2182 = vcmask 1044480
        %v2184 = vsel %vm2182, %v2171, 0
        %v2187 = vsel %vm2182, %v2172, 0
        %2189 = vmatprep.subr.bf16.mxu0 0
        %2190 = vmatpush1.bf16.msra.mxu0 0
        %2191 = vmatprep.subr.bf16.mxu0 0
        %2192 = vmatpush1.bf16.msra.mxu0 0
        %2193 = vmatprep.subr.bf16.mxu0 0
        %2194 = vmatpush1.bf16.msra.mxu0 0
        %2195 = vmatprep.subr.bf16.mxu0 0
        %2196 = vmatpush1.bf16.msra.mxu0 0
        %2197 = vmatprep.subr.bf16.mxu0 0
        %2198 = vmatpush1.bf16.msra.mxu0 0
        %2199 = vmatprep.subr.bf16.mxu0 0
        %2200 = vmatpush1.bf16.msra.mxu0 0
        %2201 = vmatprep.subr.bf16.mxu0 0
        %2202 = vmatpush1.bf16.msra.mxu0 0
        %2203 = vmatprep.subr.bf16.mxu0 %v2187
        %2204 = vmatpush1.bf16.msra.mxu0 %v2184
        %2205 = vmatprep.subr.bf16.mxu0 0
        %2206 = vmatpush2.bf16.msra.mxu0 0
        %2207 = vmatprep.subr.bf16.mxu0 0
        %2208 = vmatpush2.bf16.msra.mxu0 0
        %2209 = vmatprep.subr.bf16.mxu0 0
        %2210 = vmatpush2.bf16.msra.mxu0 0
        %2211 = vmatprep.subr.bf16.mxu0 0
        %2212 = vmatpush2.bf16.msra.mxu0 0
        %2213 = vmatprep.subr.bf16.mxu0 0
        %2214 = vmatpush2.bf16.msra.mxu0 0
        %2215 = vmatprep.subr.bf16.mxu0 0
        %2216 = vmatpush2.bf16.msra.mxu0 0
        %2217 = vmatprep.subr.bf16.mxu0 0
        %2218 = vmatpush2.bf16.msra.mxu0 0
        %2219 = vmatprep.subr.bf16.mxu0 0
        %2220 = vmatpush2.bf16.msra.mxu0 0
        %2221 = vmatprep.mubr.bf16.mxu0 0
        %2222 = vmatmul.mubr.bf16.gmra.mxu0 %v2180
        %v2223 = vpop.f32.mrf.mxu0
        %v2224 = vadd.f32 0.0, %v2223
        %v2225 = vpop.f32.mrf.mxu0
        %v2226 = vadd.f32 0.0, %v2225
        %v2227 = vpop.f32.mrf.mxu0
        %v2228 = vadd.f32 0.0, %v2227
        %v2229 = vpop.f32.mrf.mxu0
        %v2230 = vadd.f32 0.0, %v2229
        %2231 = vdwg.mxu0
        %v2232 = vmax.f32 %v2224, %v2228
        %v2233 = vmax.f32 %v2226, %v2230
        %v2234 = vpack.c.bf16 %v2232, %v2232
        %v2235 = vpack.c.bf16 %v2233, %v2233
        %v2236 = vld [vmem:[%s8] sm:$0xff]
        %v2237 = vld [vmem:[%s8 + $0x8] sm:$0xff]
        %v2238 = vld [vmem:[%s8 + $0x10] sm:$0xff]
        %v2239 = vld [vmem:[%s8 + $0x18] sm:$0xff]
        %v2240 = vld [vmem:[%s8 + $0x20] sm:$0xff]
        %v2241 = vld [vmem:[%s8 + $0x28] sm:$0xff]
        %v2242 = vld [vmem:[%s8 + $0x30] sm:$0xff]
        %v2243 = vld [vmem:[%s8 + $0x38] sm:$0xff]
        %v2244 = vld [vmem:[%s8 + $0x40] sm:$0xff]
        %v2245 = vld [vmem:[%s8 + $0x48] sm:$0xff]
        %v2246 = vld [vmem:[%s8 + $0x50] sm:$0xff]
        %v2247 = vld [vmem:[%s8 + $0x58] sm:$0xff]
        %v2248 = vld [vmem:[%s8 + $0x60] sm:$0xff]
        %v2249 = vld [vmem:[%s8 + $0x68] sm:$0xff]
        %v2250 = vld [vmem:[%s8 + $0x70] sm:$0xff]
        %v2251 = vld [vmem:[%s8 + $0x78] sm:$0xff]
        %v2252 = vld [vmem:[%s8 + $0x80] sm:$0xff]
        %v2253 = vld [vmem:[%s8 + $0x88] sm:$0xff]
        %v2254 = vld [vmem:[%s8 + $0x90] sm:$0xff]
        %v2255 = vld [vmem:[%s8 + $0x98] sm:$0xff]
        %v2276 = vunpack.c.l.b16 %v2236
        %v2277 = vunpack.c.h.b16 %v2236
        %v2278 = vunpack.c.l.b16 %v2237
        %v2279 = vunpack.c.h.b16 %v2237
        %v2280 = vunpack.c.l.b16 %v2238
        %v2281 = vunpack.c.h.b16 %v2238
        %v2282 = vunpack.c.l.b16 %v2239
        %v2283 = vunpack.c.h.b16 %v2239
        %v2284 = vunpack.c.l.b16 %v2240
        %v2285 = vunpack.c.h.b16 %v2240
        %v2286 = vunpack.c.l.b16 %v2241
        %v2287 = vunpack.c.h.b16 %v2241
        %v2288 = vunpack.c.l.b16 %v2242
        %v2289 = vunpack.c.h.b16 %v2242
        %v2290 = vunpack.c.l.b16 %v2243
        %v2291 = vunpack.c.h.b16 %v2243
        %v2292 = vunpack.c.l.b16 %v2244
        %v2293 = vunpack.c.h.b16 %v2244
        %v2294 = vunpack.c.l.b16 %v2245
        %v2295 = vunpack.c.h.b16 %v2245
        %v2296 = vunpack.c.l.b16 %v2246
        %v2297 = vunpack.c.h.b16 %v2246
        %v2298 = vunpack.c.l.b16 %v2247
        %v2299 = vunpack.c.h.b16 %v2247
        %v2300 = vunpack.c.l.b16 %v2248
        %v2301 = vunpack.c.h.b16 %v2248
        %v2302 = vunpack.c.l.b16 %v2249
        %v2303 = vunpack.c.h.b16 %v2249
        %v2304 = vunpack.c.l.b16 %v2250
        %v2305 = vunpack.c.h.b16 %v2250
        %v2306 = vunpack.c.l.b16 %v2251
        %v2307 = vunpack.c.h.b16 %v2251
        %v2308 = vunpack.c.l.b16 %v2252
        %v2309 = vunpack.c.h.b16 %v2252
        %v2310 = vunpack.c.l.b16 %v2253
        %v2311 = vunpack.c.h.b16 %v2253
        %v2312 = vunpack.c.l.b16 %v2254
        %v2313 = vunpack.c.h.b16 %v2254
        %v2314 = vunpack.c.l.b16 %v2255
        %v2315 = vunpack.c.h.b16 %v2255
        %v2316 = vpack.c.b16 %v2278, %v2276
        %v2317 = vpack.c.b16 %v2279, %v2277
        %v2318 = vpack.c.b16 %v2282, %v2280
        %v2319 = vpack.c.b16 %v2283, %v2281
        %v2320 = vpack.c.b16 %v2286, %v2284
        %v2321 = vpack.c.b16 %v2287, %v2285
        %v2322 = vpack.c.b16 %v2290, %v2288
        %v2323 = vpack.c.b16 %v2291, %v2289
        %v2324 = vpack.c.b16 %v2294, %v2292
        %v2325 = vpack.c.b16 %v2295, %v2293
        %v2326 = vpack.c.b16 %v2298, %v2296
        %v2327 = vpack.c.b16 %v2299, %v2297
        %v2328 = vpack.c.b16 %v2302, %v2300
        %v2329 = vpack.c.b16 %v2303, %v2301
        %v2330 = vpack.c.b16 %v2306, %v2304
        %v2331 = vpack.c.b16 %v2307, %v2305
        %v2332 = vpack.c.b16 %v2310, %v2308
        %v2333 = vpack.c.b16 %v2311, %v2309
        %v2334 = vpack.c.b16 %v2314, %v2312
        %v2335 = vpack.c.b16 %v2315, %v2313
        %vm2356 = vcmask 261120
        %v2358 = vsel %vm2356, %v2235, 0
        %2360 = vmatprep.subr.bf16.mxu0 %v2331
        %2361 = vmatpush1.bf16.msra.mxu0 %v2330
        %2362 = vmatprep.subr.bf16.mxu0 %v2329
        %2363 = vmatpush1.bf16.msra.mxu0 %v2328
        %2364 = vmatprep.subr.bf16.mxu0 %v2327
        %2365 = vmatpush1.bf16.msra.mxu0 %v2326
        %2366 = vmatprep.subr.bf16.mxu0 %v2325
        %2367 = vmatpush1.bf16.msra.mxu0 %v2324
        %2368 = vmatprep.subr.bf16.mxu0 %v2323
        %2369 = vmatpush1.bf16.msra.mxu0 %v2322
        %2370 = vmatprep.subr.bf16.mxu0 %v2321
        %2371 = vmatpush1.bf16.msra.mxu0 %v2320
        %2372 = vmatprep.subr.bf16.mxu0 %v2319
        %2373 = vmatpush1.bf16.msra.mxu0 %v2318
        %2374 = vmatprep.subr.bf16.mxu0 %v2317
        %2375 = vmatpush1.bf16.msra.mxu0 %v2316
        %2376 = vmatprep.subr.bf16.mxu0 0
        %2377 = vmatpush2.bf16.msra.mxu0 0
        %2378 = vmatprep.subr.bf16.mxu0 0
        %2379 = vmatpush2.bf16.msra.mxu0 0
        %2380 = vmatprep.subr.bf16.mxu0 0
        %2381 = vmatpush2.bf16.msra.mxu0 0
        %2382 = vmatprep.subr.bf16.mxu0 0
        %2383 = vmatpush2.bf16.msra.mxu0 0
        %2384 = vmatprep.subr.bf16.mxu0 0
        %2385 = vmatpush2.bf16.msra.mxu0 0
        %2386 = vmatprep.subr.bf16.mxu0 0
        %2387 = vmatpush2.bf16.msra.mxu0 0
        %2388 = vmatprep.subr.bf16.mxu0 %v2335
        %2389 = vmatpush2.bf16.msra.mxu0 %v2334
        %2390 = vmatprep.subr.bf16.mxu0 %v2333
        %2391 = vmatpush2.bf16.msra.mxu0 %v2332
        %2392 = vmatprep.mubr.bf16.mxu0 %v2358
        %2393 = vmatmul.mubr.bf16.gmra.mxu0 %v2234
        %v2394 = vpop.f32.mrf.mxu0
        %v2395 = vadd.f32 0.0, %v2394
        %v2396 = vpop.f32.mrf.mxu0
        %v2397 = vadd.f32 0.0, %v2396
        %v2398 = vpop.f32.mrf.mxu0
        %v2399 = vpop.f32.mrf.mxu0
        %2400 = vdwg.mxu0
        %v2401 = vmax.f32 %v2395, %v2397
        %v2403 = vrot.slane %v2401, 1
        %2404 = vrot.lane.b32.xlu0 %v2403, 80
        %v2405 = vpop.permute.xlu0 %2404
        %v2407 = vrot.slane %v2401, 2
        %2408 = vrot.lane.b32.xlu0 %v2407, 32
        %v2409 = vpop.permute.xlu0 %2408
        %v2411 = vrot.slane %v2401, 3
        %2412 = vrot.lane.b32.xlu0 %v2411, 112
        %v2413 = vpop.permute.xlu0 %2412
        %v2415 = vrot.slane %v2401, 4
        %2416 = vrot.lane.b32.xlu0 %v2415, 64
        %v2417 = vpop.permute.xlu0 %2416
        %vm2419 = vcmask 654336
        %v2420 = vsel %vm2419, %v2401, %v2405
        %v2421 = vsel %vm2356, %v2405, %v2409
        %vm2422 = vcmask 916480
        %v2423 = vsel %vm2422, %v2421, %v2413
        %vm2424 = vcmask 523264
        %v2425 = vsel %vm2424, %v2413, %v2417
        %v2426 = vpack.c.bf16 %v2420, %v2420
        %v2427 = vpack.c.bf16 %v2423, %v2423
        %v2428 = vpack.c.bf16 %v2425, %v2425
        %v2429 = vpack.c.bf16 %v2417, %v2417
        %v2430 = vld [vmem:[%s9] sm:$0xf]
        %v2431 = vld [vmem:[%s9 + $0x4] sm:$0xf]
        %v2432 = vld [vmem:[%s9 + $0x8] sm:$0xf]
        %v2433 = vld [vmem:[%s9 + $0xc] sm:$0xf]
        %v2434 = vld [vmem:[%s9 + $0x10] sm:$0xf]
        %v2435 = vld [vmem:[%s9 + $0x14] sm:$0xf]
        %v2436 = vld [vmem:[%s9 + $0x18] sm:$0xf]
        %v2437 = vld [vmem:[%s9 + $0x1c] sm:$0xf]
        %v2438 = vld [vmem:[%s9 + $0x20] sm:$0xf]
        %v2439 = vld [vmem:[%s9 + $0x24] sm:$0xf]
        %v2440 = vld [vmem:[%s9 + $0x28] sm:$0xf]
        %v2441 = vld [vmem:[%s9 + $0x2c] sm:$0xf]
        %v2442 = vld [vmem:[%s9 + $0x30] sm:$0xf]
        %v2443 = vld [vmem:[%s9 + $0x34] sm:$0xf]
        %v2444 = vld [vmem:[%s9 + $0x38] sm:$0xf]
        %v2445 = vld [vmem:[%s9 + $0x3c] sm:$0xf]
        %v2446 = vld [vmem:[%s9 + $0x40] sm:$0xf]
        %v2447 = vld [vmem:[%s9 + $0x44] sm:$0xf]
        %v2448 = vld [vmem:[%s9 + $0x48] sm:$0xf]
        %v2449 = vld [vmem:[%s9 + $0x4c] sm:$0xf]
        %v2450 = vld [vmem:[%s9 + $0x50] sm:$0xf]
        %v2451 = vld [vmem:[%s9 + $0x54] sm:$0xf]
        %v2452 = vld [vmem:[%s9 + $0x58] sm:$0xf]
        %v2453 = vld [vmem:[%s9 + $0x5c] sm:$0xf]
        %v2454 = vld [vmem:[%s9 + $0x60] sm:$0xf]
        %v2455 = vld [vmem:[%s9 + $0x64] sm:$0xf]
        %v2456 = vld [vmem:[%s9 + $0x68] sm:$0xf]
        %v2457 = vld [vmem:[%s9 + $0x6c] sm:$0xf]
        %v2458 = vld [vmem:[%s9 + $0x70] sm:$0xf]
        %v2459 = vld [vmem:[%s9 + $0x74] sm:$0xf]
        %v2460 = vld [vmem:[%s9 + $0x78] sm:$0xf]
        %v2461 = vld [vmem:[%s9 + $0x7c] sm:$0xf]
        %v2462 = vld [vmem:[%s9 + $0x80] sm:$0xf]
        %v2463 = vld [vmem:[%s9 + $0x84] sm:$0xf]
        %v2464 = vld [vmem:[%s9 + $0x88] sm:$0xf]
        %v2465 = vld [vmem:[%s9 + $0x8c] sm:$0xf]
        %v2466 = vld [vmem:[%s9 + $0x90] sm:$0xf]
        %v2467 = vld [vmem:[%s9 + $0x94] sm:$0xf]
        %v2468 = vld [vmem:[%s9 + $0x98] sm:$0xf]
        %v2469 = vld [vmem:[%s9 + $0x9c] sm:$0xf]
        %v2470 = vld [vmem:[%s9 + $0xa0] sm:$0xf]
        %v2471 = vld [vmem:[%s9 + $0xa4] sm:$0xf]
        %v2472 = vld [vmem:[%s9 + $0xa8] sm:$0xf]
        %v2473 = vld [vmem:[%s9 + $0xac] sm:$0xf]
        %v2474 = vld [vmem:[%s9 + $0xb0] sm:$0xf]
        %v2475 = vld [vmem:[%s9 + $0xb4] sm:$0xf]
        %v2476 = vld [vmem:[%s9 + $0xb8] sm:$0xf]
        %v2477 = vld [vmem:[%s9 + $0xbc] sm:$0xf]
        %v2478 = vld [vmem:[%s9 + $0xc0] sm:$0xf]
        %v2479 = vld [vmem:[%s9 + $0xc4] sm:$0xf]
        %v2480 = vld [vmem:[%s10] sm:$0x1]
        %v2531 = vunpack.c.l.b16 %v2430
        %v2532 = vunpack.c.l.b16 %v2431
        %v2533 = vunpack.c.l.b16 %v2432
        %v2534 = vunpack.c.l.b16 %v2433
        %v2535 = vunpack.c.l.b16 %v2434
        %v2536 = vunpack.c.l.b16 %v2435
        %v2537 = vunpack.c.l.b16 %v2436
        %v2538 = vunpack.c.l.b16 %v2437
        %v2539 = vunpack.c.l.b16 %v2438
        %v2540 = vunpack.c.l.b16 %v2439
        %v2541 = vunpack.c.l.b16 %v2440
        %v2542 = vunpack.c.l.b16 %v2441
        %v2543 = vunpack.c.l.b16 %v2442
        %v2544 = vunpack.c.l.b16 %v2443
        %v2545 = vunpack.c.l.b16 %v2444
        %v2546 = vunpack.c.l.b16 %v2445
        %v2547 = vunpack.c.l.b16 %v2446
        %v2548 = vunpack.c.l.b16 %v2447
        %v2549 = vunpack.c.l.b16 %v2448
        %v2550 = vunpack.c.l.b16 %v2449
        %v2551 = vunpack.c.l.b16 %v2450
        %v2552 = vunpack.c.l.b16 %v2451
        %v2553 = vunpack.c.l.b16 %v2452
        %v2554 = vunpack.c.l.b16 %v2453
        %v2555 = vunpack.c.l.b16 %v2454
        %v2556 = vunpack.c.l.b16 %v2455
        %v2557 = vunpack.c.l.b16 %v2456
        %v2558 = vunpack.c.l.b16 %v2457
        %v2559 = vunpack.c.l.b16 %v2458
        %v2560 = vunpack.c.l.b16 %v2459
        %v2561 = vunpack.c.l.b16 %v2460
        %v2562 = vunpack.c.l.b16 %v2461
        %v2563 = vunpack.c.l.b16 %v2462
        %v2564 = vunpack.c.l.b16 %v2463
        %v2565 = vunpack.c.l.b16 %v2464
        %v2566 = vunpack.c.l.b16 %v2465
        %v2567 = vunpack.c.l.b16 %v2466
        %v2568 = vunpack.c.l.b16 %v2467
        %v2569 = vunpack.c.l.b16 %v2468
        %v2570 = vunpack.c.l.b16 %v2469
        %v2571 = vunpack.c.l.b16 %v2470
        %v2572 = vunpack.c.l.b16 %v2471
        %v2573 = vunpack.c.l.b16 %v2472
        %v2574 = vunpack.c.l.b16 %v2473
        %v2575 = vunpack.c.l.b16 %v2474
        %v2576 = vunpack.c.l.b16 %v2475
        %v2577 = vunpack.c.l.b16 %v2476
        %v2578 = vunpack.c.l.b16 %v2477
        %v2579 = vunpack.c.l.b16 %v2478
        %v2580 = vunpack.c.l.b16 %v2479
        %v2581 = vpack.c.b16 %v2532, %v2531
        %v2582 = vpack.c.b16 %v2534, %v2533
        %v2583 = vpack.c.b16 %v2536, %v2535
        %v2584 = vpack.c.b16 %v2538, %v2537
        %v2585 = vpack.c.b16 %v2540, %v2539
        %v2586 = vpack.c.b16 %v2542, %v2541
        %v2587 = vpack.c.b16 %v2544, %v2543
        %v2588 = vpack.c.b16 %v2546, %v2545
        %v2589 = vpack.c.b16 %v2548, %v2547
        %v2590 = vpack.c.b16 %v2550, %v2549
        %v2591 = vpack.c.b16 %v2552, %v2551
        %v2592 = vpack.c.b16 %v2554, %v2553
        %v2593 = vpack.c.b16 %v2556, %v2555
        %v2594 = vpack.c.b16 %v2558, %v2557
        %v2595 = vpack.c.b16 %v2560, %v2559
        %v2596 = vpack.c.b16 %v2562, %v2561
        %v2597 = vpack.c.b16 %v2564, %v2563
        %v2598 = vpack.c.b16 %v2566, %v2565
        %v2599 = vpack.c.b16 %v2568, %v2567
        %v2600 = vpack.c.b16 %v2570, %v2569
        %v2601 = vpack.c.b16 %v2572, %v2571
        %v2602 = vpack.c.b16 %v2574, %v2573
        %v2603 = vpack.c.b16 %v2576, %v2575
        %v2604 = vpack.c.b16 %v2578, %v2577
        %v2605 = vpack.c.b16 %v2580, %v2579
        %vm2631 = vcmask 130048
        %v2633 = vsel %vm2631, %v2429, 0
        %2635 = vmatprep.subr.bf16.mxu0 0
        %2636 = vmatpush1.bf16.msra.mxu0 %v2588
        %2637 = vmatprep.subr.bf16.mxu0 0
        %2638 = vmatpush1.bf16.msra.mxu0 %v2587
        %2639 = vmatprep.subr.bf16.mxu0 0
        %2640 = vmatpush1.bf16.msra.mxu0 %v2586
        %2641 = vmatprep.subr.bf16.mxu0 0
        %2642 = vmatpush1.bf16.msra.mxu0 %v2585
        %2643 = vmatprep.subr.bf16.mxu0 0
        %2644 = vmatpush1.bf16.msra.mxu0 %v2584
        %2645 = vmatprep.subr.bf16.mxu0 0
        %2646 = vmatpush1.bf16.msra.mxu0 %v2583
        %2647 = vmatprep.subr.bf16.mxu0 0
        %2648 = vmatpush1.bf16.msra.mxu0 %v2582
        %2649 = vmatprep.subr.bf16.mxu0 0
        %2650 = vmatpush1.bf16.msra.mxu0 %v2581
        %2651 = vmatprep.subr.bf16.mxu0 0
        %2652 = vmatpush2.bf16.msra.mxu0 %v2596
        %2653 = vmatprep.subr.bf16.mxu0 0
        %2654 = vmatpush2.bf16.msra.mxu0 %v2595
        %2655 = vmatprep.subr.bf16.mxu0 0
        %2656 = vmatpush2.bf16.msra.mxu0 %v2594
        %2657 = vmatprep.subr.bf16.mxu0 0
        %2658 = vmatpush2.bf16.msra.mxu0 %v2593
        %2659 = vmatprep.subr.bf16.mxu0 0
        %2660 = vmatpush2.bf16.msra.mxu0 %v2592
        %2661 = vmatprep.subr.bf16.mxu0 0
        %2662 = vmatpush2.bf16.msra.mxu0 %v2591
        %2663 = vmatprep.subr.bf16.mxu0 0
        %2664 = vmatpush2.bf16.msra.mxu0 %v2590
        %2665 = vmatprep.subr.bf16.mxu0 0
        %2666 = vmatpush2.bf16.msra.mxu0 %v2589
        %2667 = vmatprep.mubr.bf16.mxu0 %v2427
        %2668 = vmatmul.mubr.bf16.gmra.mxu0 %v2426
        %v2669 = vpop.f32.mrf.mxu0
        %v2670 = vadd.f32 %v2480, %v2669
        %v2671 = vpop.f32.mrf.mxu0
        %v2672 = vpop.f32.mrf.mxu0
        %v2673 = vpop.f32.mrf.mxu0
        %2674 = vdwg.mxu0
        %2675 = vmatprep.subr.bf16.mxu0 0
        %2676 = vmatpush1.bf16.msra.mxu0 %v2604
        %2677 = vmatprep.subr.bf16.mxu0 0
        %2678 = vmatpush1.bf16.msra.mxu0 %v2603
        %2679 = vmatprep.subr.bf16.mxu0 0
        %2680 = vmatpush1.bf16.msra.mxu0 %v2602
        %2681 = vmatprep.subr.bf16.mxu0 0
        %2682 = vmatpush1.bf16.msra.mxu0 %v2601
        %2683 = vmatprep.subr.bf16.mxu0 0
        %2684 = vmatpush1.bf16.msra.mxu0 %v2600
        %2685 = vmatprep.subr.bf16.mxu0 0
        %2686 = vmatpush1.bf16.msra.mxu0 %v2599
        %2687 = vmatprep.subr.bf16.mxu0 0
        %2688 = vmatpush1.bf16.msra.mxu0 %v2598
        %2689 = vmatprep.subr.bf16.mxu0 0
        %2690 = vmatpush1.bf16.msra.mxu0 %v2597
        %2691 = vmatprep.subr.bf16.mxu0 0
        %2692 = vmatpush2.bf16.msra.mxu0 0
        %2693 = vmatprep.subr.bf16.mxu0 0
        %2694 = vmatpush2.bf16.msra.mxu0 0
        %2695 = vmatprep.subr.bf16.mxu0 0
        %2696 = vmatpush2.bf16.msra.mxu0 0
        %2697 = vmatprep.subr.bf16.mxu0 0
        %2698 = vmatpush2.bf16.msra.mxu0 0
        %2699 = vmatprep.subr.bf16.mxu0 0
        %2700 = vmatpush2.bf16.msra.mxu0 0
        %2701 = vmatprep.subr.bf16.mxu0 0
        %2702 = vmatpush2.bf16.msra.mxu0 0
        %2703 = vmatprep.subr.bf16.mxu0 0
        %2704 = vmatpush2.bf16.msra.mxu0 0
        %2705 = vmatprep.subr.bf16.mxu0 0
        %2706 = vmatpush2.bf16.msra.mxu0 %v2605
        %2707 = vmatprep.mubr.bf16.mxu0 %v2633
        %2708 = vmatmul.mubr.bf16.gmra.mxu0 %v2428
        %v2709 = vpop.f32.mrf.mxu0
        %v2710 = vadd.f32 %v2670, %v2709
        %v2711 = vpop.f32.mrf.mxu0
        %v2712 = vpop.f32.mrf.mxu0
        %v2713 = vpop.f32.mrf.mxu0
        %2714 = vdwg.mxu0
        %v2715 = vmax.f32 %v2710, 0.0
        %v2716 = vpack.c.bf16 %v2715, %v2715
        %v2717 = vld [vmem:[%s11] sm:$0xf]
        %v2718 = vld [vmem:[%s11 + $0x4] sm:$0xf]
        %v2719 = vld [vmem:[%s11 + $0x8] sm:$0xf]
        %v2720 = vld [vmem:[%s11 + $0xc] sm:$0xf]
        %v2721 = vld [vmem:[%s11 + $0x10] sm:$0xf]
        %v2722 = vld [vmem:[%s11 + $0x14] sm:$0xf]
        %v2723 = vld [vmem:[%s11 + $0x18] sm:$0xf]
        %v2724 = vld [vmem:[%s11 + $0x1c] sm:$0xf]
        %v2725 = vld [vmem:[%s11 + $0x20] sm:$0xf]
        %v2726 = vld [vmem:[%s11 + $0x24] sm:$0xf]
        %v2727 = vld [vmem:[%s11 + $0x28] sm:$0xf]
        %v2728 = vld [vmem:[%s11 + $0x2c] sm:$0xf]
        %v2729 = vld [vmem:[%s11 + $0x30] sm:$0xf]
        %v2730 = vld [vmem:[%s11 + $0x34] sm:$0xf]
        %v2731 = vld [vmem:[%s11 + $0x38] sm:$0xf]
        %v2732 = vld [vmem:[%s12] sm:$0x1]
        %v2748 = vunpack.c.l.b16 %v2717
        %v2749 = vunpack.c.l.b16 %v2718
        %v2750 = vunpack.c.l.b16 %v2719
        %v2751 = vunpack.c.l.b16 %v2720
        %v2752 = vunpack.c.l.b16 %v2721
        %v2753 = vunpack.c.l.b16 %v2722
        %v2754 = vunpack.c.l.b16 %v2723
        %v2755 = vunpack.c.l.b16 %v2724
        %v2756 = vunpack.c.l.b16 %v2725
        %v2757 = vunpack.c.l.b16 %v2726
        %v2758 = vunpack.c.l.b16 %v2727
        %v2759 = vunpack.c.l.b16 %v2728
        %v2760 = vunpack.c.l.b16 %v2729
        %v2761 = vunpack.c.l.b16 %v2730
        %v2762 = vunpack.c.l.b16 %v2731
        %v2763 = vpack.c.b16 %v2749, %v2748
        %v2764 = vpack.c.b16 %v2751, %v2750
        %v2765 = vpack.c.b16 %v2753, %v2752
        %v2766 = vpack.c.b16 %v2755, %v2754
        %v2767 = vpack.c.b16 %v2757, %v2756
        %v2768 = vpack.c.b16 %v2759, %v2758
        %v2769 = vpack.c.b16 %v2761, %v2760
        %v2770 = vpack.c.b16 %v2762, %v2762
        %vm2778 = vcmask 982016
        %v2780 = vsel %vm2778, %v2716, 0
        %v2783 = vsel %vm1472, %v2770, 0
        %2785 = vmatprep.subr.bf16.mxu0 0
        %2786 = vmatpush1.bf16.msra.mxu0 %v2783
        %2787 = vmatprep.subr.bf16.mxu0 0
        %2788 = vmatpush1.bf16.msra.mxu0 %v2769
        %2789 = vmatprep.subr.bf16.mxu0 0
        %2790 = vmatpush1.bf16.msra.mxu0 %v2768
        %2791 = vmatprep.subr.bf16.mxu0 0
        %2792 = vmatpush1.bf16.msra.mxu0 %v2767
        %2793 = vmatprep.subr.bf16.mxu0 0
        %2794 = vmatpush1.bf16.msra.mxu0 %v2766
        %2795 = vmatprep.subr.bf16.mxu0 0
        %2796 = vmatpush1.bf16.msra.mxu0 %v2765
        %2797 = vmatprep.subr.bf16.mxu0 0
        %2798 = vmatpush1.bf16.msra.mxu0 %v2764
        %2799 = vmatprep.subr.bf16.mxu0 0
        %2800 = vmatpush1.bf16.msra.mxu0 %v2763
        %2801 = vmatprep.subr.bf16.mxu0 0
        %2802 = vmatpush2.bf16.msra.mxu0 0
        %2803 = vmatprep.subr.bf16.mxu0 0
        %2804 = vmatpush2.bf16.msra.mxu0 0
        %2805 = vmatprep.subr.bf16.mxu0 0
        %2806 = vmatpush2.bf16.msra.mxu0 0
        %2807 = vmatprep.subr.bf16.mxu0 0
        %2808 = vmatpush2.bf16.msra.mxu0 0
        %2809 = vmatprep.subr.bf16.mxu0 0
        %2810 = vmatpush2.bf16.msra.mxu0 0
        %2811 = vmatprep.subr.bf16.mxu0 0
        %2812 = vmatpush2.bf16.msra.mxu0 0
        %2813 = vmatprep.subr.bf16.mxu0 0
        %2814 = vmatpush2.bf16.msra.mxu0 0
        %2815 = vmatprep.subr.bf16.mxu0 0
        %2816 = vmatpush2.bf16.msra.mxu0 0
        %2817 = vmatprep.mubr.bf16.mxu0 0
        %2818 = vmatmul.mubr.bf16.gmra.mxu0 %v2780
        %v2819 = vpop.f32.mrf.mxu0
        %v2820 = vadd.f32 %v2732, %v2819
        %v2821 = vpop.f32.mrf.mxu0
        %v2822 = vpop.f32.mrf.mxu0
        %v2823 = vpop.f32.mrf.mxu0
        %2824 = vdwg.mxu0
        %v2825 = vmax.f32 %v2820, 0.0
        %v2826 = vpack.c.bf16 %v2825, %v2825
        %v2827 = vld [vmem:[%s13] sm:$0xf]
        %v2828 = vld [vmem:[%s13 + $0x4] sm:$0xf]
        %v2829 = vld [vmem:[%s13 + $0x8] sm:$0xf]
        %v2830 = vld [vmem:[%s13 + $0xc] sm:$0xf]
        %v2831 = vld [vmem:[%s13 + $0x10] sm:$0xf]
        %v2832 = vld [vmem:[%s13 + $0x14] sm:$0xf]
        %v2833 = vld [vmem:[%s13 + $0x18] sm:$0xf]
        %v2834 = vld [vmem:[%s13 + $0x1c] sm:$0xf]
        %v2835 = vld [vmem:[%s13 + $0x20] sm:$0xf]
        %v2836 = vld [vmem:[%s13 + $0x24] sm:$0xf]
        %v2837 = vld [vmem:[%s13 + $0x28] sm:$0x3]
        %v2838 = vld [vmem:[%s14] sm:$0x1]
        %v2850 = vunpack.c.l.b16 %v2827
        %v2851 = vunpack.c.l.b16 %v2828
        %v2852 = vunpack.c.l.b16 %v2829
        %v2853 = vunpack.c.l.b16 %v2830
        %v2854 = vunpack.c.l.b16 %v2831
        %v2855 = vunpack.c.l.b16 %v2832
        %v2856 = vunpack.c.l.b16 %v2833
        %v2857 = vunpack.c.l.b16 %v2834
        %v2858 = vunpack.c.l.b16 %v2835
        %v2859 = vunpack.c.l.b16 %v2836
        %v2860 = vunpack.c.l.b16 %v2837
        %v2861 = vpack.c.b16 %v2851, %v2850
        %v2862 = vpack.c.b16 %v2853, %v2852
        %v2863 = vpack.c.b16 %v2855, %v2854
        %v2864 = vpack.c.b16 %v2857, %v2856
        %v2865 = vpack.c.b16 %v2859, %v2858
        %v2866 = vpack.c.b16 %v2860, %v2860
        %v2873 = vsel %vm1603, %v2826, 0
        %v2876 = vsel %vm1607, %v2866, 0
        %2878 = vmatprep.subr.bf16.mxu0 0
        %2879 = vmatpush1.bf16.msra.mxu0 0
        %2880 = vmatprep.subr.bf16.mxu0 0
        %2881 = vmatpush1.bf16.msra.mxu0 0
        %2882 = vmatprep.subr.bf16.mxu0 0
        %2883 = vmatpush1.bf16.msra.mxu0 %v2876
        %2884 = vmatprep.subr.bf16.mxu0 0
        %2885 = vmatpush1.bf16.msra.mxu0 %v2865
        %2886 = vmatprep.subr.bf16.mxu0 0
        %2887 = vmatpush1.bf16.msra.mxu0 %v2864
        %2888 = vmatprep.subr.bf16.mxu0 0
        %2889 = vmatpush1.bf16.msra.mxu0 %v2863
        %2890 = vmatprep.subr.bf16.mxu0 0
        %2891 = vmatpush1.bf16.msra.mxu0 %v2862
        %2892 = vmatprep.subr.bf16.mxu0 0
        %2893 = vmatpush1.bf16.msra.mxu0 %v2861
        %2894 = vmatprep.subr.bf16.mxu0 0
        %2895 = vmatpush2.bf16.msra.mxu0 0
        %2896 = vmatprep.subr.bf16.mxu0 0
        %2897 = vmatpush2.bf16.msra.mxu0 0
        %2898 = vmatprep.subr.bf16.mxu0 0
        %2899 = vmatpush2.bf16.msra.mxu0 0
        %2900 = vmatprep.subr.bf16.mxu0 0
        %2901 = vmatpush2.bf16.msra.mxu0 0
        %2902 = vmatprep.subr.bf16.mxu0 0
        %2903 = vmatpush2.bf16.msra.mxu0 0
        %2904 = vmatprep.subr.bf16.mxu0 0
        %2905 = vmatpush2.bf16.msra.mxu0 0
        %2906 = vmatprep.subr.bf16.mxu0 0
        %2907 = vmatpush2.bf16.msra.mxu0 0
        %2908 = vmatprep.subr.bf16.mxu0 0
        %2909 = vmatpush2.bf16.msra.mxu0 0
        %2910 = vmatprep.mubr.bf16.mxu0 0
        %2911 = vmatmul.mubr.bf16.gmra.mxu0 %v2873
        %v2912 = vpop.f32.mrf.mxu0
        %v2913 = vadd.f32 %v2838, %v2912
        %v2914 = vpop.f32.mrf.mxu0
        %v2915 = vpop.f32.mrf.mxu0
        %v2916 = vpop.f32.mrf.mxu0
        %2917 = vdwg.mxu0
        %vm2918 = vcmask 8192
        %2919 = vst.msk [vmem:[%s486] sm:$0x1] %vm2918, %v2913
        %s2920 = sand.u32 %s357, 1
        %s2921 = scalar_lea.sflag [#allocation3], %s2920
        %s2922 = sand.u32 %s357, 1
        %s2923 = scalar_lea.vmem [#allocation2], %s2922
        // Predicated region
        $region81: #{net_forward.1} parent=79 // pred_check
          %p2924 = pneg %p367
        $region82: #{net_forward.1} parent=79 // pred_check_branch
          %2926 = sbr.rel (%p2924) target = $region84
        $region83: #{net_forward.1} parent=79 // pred_region
          %s2928 = ssub.s32 16, 16
          %2929 = vsyncadd %s2921, %s2928
          %s2930 = smul.addr %s29, 16
          %s2931 = scalar_lea.hbm %s15, %s2930
          %s2933 = sshll.u32 %s2923, 4
          %s2934 = int_to_ptr.vmem [resolvable:$true] %s2933
          %2936 = dma.vmem_to_hbm [thread:$0]  %s2934, 16, %s2931, %s2921
        $region84: #{net_forward.1} parent=79 // pred_fallthru
          _
      $region80: #{net_forward.1} parent=5 // pred_fallthru
        _
      %p2937 = scmp.le.s32.totalorder 2, %s24
      // Predicated region
      $region85: #{net_forward.1} parent=5 // pred_check
        %p2938 = pneg %p2937
      $region86: #{net_forward.1} parent=5 // pred_check_branch
        %2940 = sbr.rel (%p2938) target = $region88
      $region87: #{net_forward.1} parent=5 // pred_region
        %s2941 = ssub.s32 %s24, 2
        // Predicated region
        $region89: #{net_forward.1} parent=87 // pred_check
          %p2942 = pneg %p373
        $region90: #{net_forward.1} parent=87 // pred_check_branch
          %2944 = sbr.rel (%p2942) target = $region92
        $region91: #{net_forward.1} parent=87 // pred_region
          %s2945 = sand.u32 %s358, 1
          %s2946 = scalar_lea.sflag [#allocation3], %s2945
          %s2947 = sand.u32 %s358, 1
          %s2948 = scalar_lea.vmem [#allocation2], %s2947
          %2949 = dma.done %s2946, 16
        $region92: #{net_forward.1} parent=87 // pred_fallthru
          _
      $region88: #{net_forward.1} parent=5 // pred_fallthru
        _
    $region6: #{net_forward.1} parent=1 // loop_footer
      %s28 = sadd.s32 1, %s24
    $region7: #{net_forward.1} parent=1 // loop_footer_branch
      %23 = sbr.rel target = $region3
    $region8: #{net_forward.1} parent=1 // loop_exit
      _
    %2950 = vsyncpa [#allocation3], 1
    %s2951 = scalar_lea.sflag [#allocation3], 1
    %2952 = vsyncpa %s2951, 1

</llo_original>
